<compile_context>
chip_gen: v7x
topology: tpu7x:2x2x1
jax: 0.10.0
libtpu: 0.0.40
codegen_flags: <defaults>
</compile_context>

<pallas_src>
import functools

import jax
import jax.numpy as jnp
from jax.experimental import pallas as pl
from jax.experimental.pallas import tpu as pltpu


def _round_up(x, m):
    return (x + m - 1) // m * m


def mmoe_kernel(emb_ref, w1_ref, b1_ref, w2_ref, b2_ref, wg_ref, bg_ref,
                sel_ref, wt1_ref, bt1_ref, wt2_ref, bt2_ref, out_ref,
                *, n_expert, bottom_dim):
    E = n_expert
    Bo = bottom_dim
    T = E
    cd = emb_ref.dtype                        # compute dtype for MXU operands

    emb = emb_ref[...]                                           # (TB, Dp)

    # fused expert fc1: one wide matmul for all experts
    h1 = jnp.dot(emb, w1_ref[...],
                 preferred_element_type=jnp.float32) + b1_ref[...]   # (TB, E*Bo)
    h1 = jnp.maximum(h1, 0.0)

    # fused expert fc2: block-diagonal weight -> all experts in one matmul
    fea = jnp.dot(h1.astype(cd), w2_ref[...],
                  preferred_element_type=jnp.float32) + b2_ref[...]  # (TB, E*Bo)

    # fused gate linears: one wide matmul for all tasks
    logits = jnp.dot(emb, wg_ref[...],
                     preferred_element_type=jnp.float32) + bg_ref[...]  # (TB, T*E)

    sel = sel_ref[...]                        # (E, E*Bo) one-hot expander

    task_feats = []
    for t in range(T):                        # T is a small compile-time const
        lt = logits[:, t * E:(t + 1) * E]                        # (TB, E)
        lt = lt - jnp.max(lt, axis=1, keepdims=True)
        p = jnp.exp(lt)
        s = jnp.sum(p, axis=1, keepdims=True)
        r = pl.reciprocal(s, approx=True)     # EUP slot
        r = r * (2.0 - s * r)                 # one Newton step -> f32 accuracy
        gate = p * r                                             # (TB, E)

        # broadcast gate[:, e] over expert e's Bo lanes with a tiny matmul,
        # then mix + reduce over contiguous Bo-wide slices (no 1-lane slices).
        gr = jnp.dot(gate.astype(cd), sel,
                     preferred_element_type=jnp.float32)         # (TB, E*Bo)
        mix = gr * fea
        tf = mix[:, 0:Bo]
        for e in range(1, E):
            tf = tf + mix[:, e * Bo:(e + 1) * Bo]
        task_feats.append(tf)                                    # (TB, Bo)

    tfp = jnp.concatenate(task_feats, axis=1)                    # (TB, T*Bo)

    # fused tower fc1 (block-diagonal) + fc2 (block-sparse -> one (TB, T) tile)
    h2 = jnp.dot(tfp.astype(cd), wt1_ref[...],
                 preferred_element_type=jnp.float32) + bt1_ref[...]  # (TB, T*Ht)
    h2 = jnp.maximum(h2, 0.0)
    o = jnp.dot(h2.astype(cd), wt2_ref[...],
                preferred_element_type=jnp.float32) + bt2_ref[...]   # (TB, T)
    out_ref[...] = jax.nn.sigmoid(o)          # single lane-contiguous store


def init_params(key, cat_dim_list, num_dim, emb_dim, bottom_dim, tower_dim,
                expert_num):
    D = (1 + len(cat_dim_list)) * emb_dim
    ks = jax.random.split(key, 16)

    def w(k, shape, scale=0.1):
        return (scale * jax.random.normal(k, shape)).astype(jnp.float32)

    params = {
        "emb_tables": [w(jax.random.fold_in(ks[0], i), (cat_dim_list[i], emb_dim))
                       for i in range(len(cat_dim_list))],
        "wn":  w(ks[1], (num_dim, emb_dim)),
        "bn":  w(ks[2], (1, emb_dim)),
        "ew1": w(ks[3], (expert_num, D, bottom_dim)),
        "eb1": w(ks[4], (expert_num, 1, bottom_dim)),
        "ew2": w(ks[5], (expert_num, bottom_dim, bottom_dim)),
        "eb2": w(ks[6], (expert_num, 1, bottom_dim)),
        "gw":  w(ks[7], (expert_num, D, expert_num)),
        "gb":  w(ks[8], (expert_num, 1, expert_num)),
        "tw1": w(ks[9], (expert_num, bottom_dim, tower_dim)),
        "tb1": w(ks[10], (expert_num, 1, tower_dim)),
        "tw2": w(ks[11], (expert_num, tower_dim, 1)),
        "tb2": w(ks[12], (expert_num, 1, 1)),
    }
    return params


def mmoe_forward(cat_x, num_x, params, *, compute_dtype=jnp.float32,
                 tile_b=512):
    f32 = jnp.float32

    # --- glue: embedding gathers + num linear + concat, lane-pad to 128 ---
    cat_embs = [tbl[cat_x[:, i]] for i, tbl in enumerate(params["emb_tables"])]
    num_emb = num_x.astype(f32) @ params["wn"] + params["bn"]
    emb = jnp.concatenate(cat_embs + [num_emb], axis=1).astype(f32)   # (B, D)

    B, D = emb.shape
    E = params["ew1"].shape[0]
    Bo = params["ew1"].shape[2]
    Ht = params["tw1"].shape[2]
    T = E

    Dp = _round_up(D, 128)
    tb = min(tile_b, _round_up(B, 8))          # batch tile (multiple of 8)
    Bp = _round_up(B, tb)

    emb_p = jnp.pad(emb, ((0, Bp - B), (0, Dp - D))).astype(compute_dtype)

    # --- fused / padded weights (built once per call; cheap) ---
    cd = compute_dtype
    w1 = jnp.pad(params["ew1"].transpose(1, 0, 2).reshape(D, E * Bo),
                 ((0, Dp - D), (0, 0))).astype(cd)                    # (Dp, E*Bo)
    b1 = params["eb1"].reshape(1, E * Bo)
    w2 = jax.scipy.linalg.block_diag(
        *[params["ew2"][e] for e in range(E)]).astype(cd)             # (E*Bo, E*Bo)
    b2 = params["eb2"].reshape(1, E * Bo)
    wg = jnp.pad(params["gw"].transpose(1, 0, 2).reshape(D, T * E),
                 ((0, Dp - D), (0, 0))).astype(cd)                    # (Dp, T*E)
    bg = params["gb"].reshape(1, T * E)
    wt1 = jax.scipy.linalg.block_diag(
        *[params["tw1"][t] for t in range(T)]).astype(cd)             # (T*Bo, T*Ht)
    bt1 = params["tb1"].reshape(1, T * Ht)
    wt2 = jax.scipy.linalg.block_diag(
        *[params["tw2"][t] for t in range(T)]).astype(cd)             # (T*Ht, T)
    bt2 = params["tb2"].reshape(1, T)

    # one-hot expander: sel[e, e*Bo + j] = 1
    sel = (jnp.arange(E * Bo)[None, :] // Bo
           == jnp.arange(E)[:, None]).astype(cd)                      # (E, E*Bo)

    consts = (w1, b1, w2, b2, wg, bg, sel, wt1, bt1, wt2, bt2)

    def const_spec(a):
        return pl.BlockSpec(a.shape, lambda i: (0, 0))

    kernel = functools.partial(mmoe_kernel, n_expert=E, bottom_dim=Bo)

    out = pl.pallas_call(
        kernel,
        out_shape=jax.ShapeDtypeStruct((Bp, E), f32),
        grid=(Bp // tb,),
        in_specs=[pl.BlockSpec((tb, Dp), lambda i: (i, 0))]
                 + [const_spec(a) for a in consts],
        out_specs=pl.BlockSpec((tb, E), lambda i: (i, 0)),
        compiler_params=pltpu.CompilerParams(
            dimension_semantics=("parallel",),      # megacore sharding
            vmem_limit_bytes=32 * 1024 * 1024),     # safe on v5e/v6e/v7x
    )(emb_p, *consts)

    out = out[:B]                                   # strip batch padding
    # PyTorch returns a list of (B, 1) tensors, one per task
    return [out[:, t:t + 1] for t in range(E)]


def mmoe_reference(cat_x, num_x, params):
    cat_embs = [tbl[cat_x[:, i]] for i, tbl in enumerate(params["emb_tables"])]
    cat_emb = jnp.concatenate(cat_embs, axis=1)
    num_emb = num_x @ params["wn"] + params["bn"]
    emb = jnp.concatenate([cat_emb, num_emb], axis=1)
    E = params["ew1"].shape[0]
    feas = []
    for e in range(E):
        h = jnp.maximum(emb @ params["ew1"][e] + params["eb1"][e], 0.0)
        feas.append(h @ params["ew2"][e] + params["eb2"][e])
    fea = jnp.stack(feas, axis=1)                       # (B, E, Bo)
    outs = []
    for t in range(E):
        gate = jax.nn.softmax(emb @ params["gw"][t] + params["gb"][t], axis=1)
        task_feat = jnp.einsum("be,beo->bo", gate, fea)
        h = jnp.maximum(task_feat @ params["tw1"][t] + params["tb1"][t], 0.0)
        o = h @ params["tw2"][t] + params["tb2"][t]
        outs.append(jax.nn.sigmoid(o))
    return outs


if __name__ == "__main__":
    # small, MMoE-consistent shapes
    cat_dim_list = [10, 20, 30]
    num_dim = 6
    emb_dim = 8
    bottom_dim = 16
    tower_dim = 16
    expert_num = 4

    key = jax.random.PRNGKey(0)
    kp, kc, kn = jax.random.split(key, 3)
    params = init_params(kp, cat_dim_list, num_dim, emb_dim, bottom_dim,
                         tower_dim, expert_num)

    B = 20
    cat_x = jnp.stack(
        [jax.random.randint(jax.random.fold_in(kc, i), (B,), 0,
                            cat_dim_list[i])
         for i in range(len(cat_dim_list))], axis=1).astype(jnp.int32)
    num_x = jax.random.normal(jax.random.fold_in(kn, 0), (B, num_dim),
                              dtype=jnp.float32)

    refs = mmoe_reference(cat_x, num_x, params)

    # 1) f32 path: multi-step grid + batch padding (B=20 -> tiles of 8)
    results = mmoe_forward(cat_x, num_x, params, tile_b=8)
    results = [jax.block_until_ready(r) for r in results]
    for r, ref in zip(results, refs):
        assert r.shape == ref.shape
        assert jnp.allclose(r, ref, rtol=1e-4, atol=1e-4), (r, ref)

    # 2) bf16 MXU operands (f32 accumulation) — perf mode for v6e/v7x
    results2 = mmoe_forward(cat_x, num_x, params, compute_dtype=jnp.bfloat16)
    results2 = [jax.block_until_ready(r) for r in results2]
    for r, ref in zip(results2, refs):
        assert r.shape == ref.shape
        assert jnp.allclose(r, ref, atol=5e-2), (r, ref)

    print("KERNEL_OK")
</pallas_src>

<mosaic_0001>
module attributes {stable_mosaic.version = 11 : i64} {
  func.func @mmoe_kernel(%arg0: i32, %arg1: memref<8x128xf32, #tpu.memory_space<vmem>>, %arg2: memref<128x64xf32, #tpu.memory_space<vmem>>, %arg3: memref<1x64xf32, #tpu.memory_space<vmem>>, %arg4: memref<64x64xf32, #tpu.memory_space<vmem>>, %arg5: memref<1x64xf32, #tpu.memory_space<vmem>>, %arg6: memref<128x16xf32, #tpu.memory_space<vmem>>, %arg7: memref<1x16xf32, #tpu.memory_space<vmem>>, %arg8: memref<4x64xf32, #tpu.memory_space<vmem>>, %arg9: memref<64x64xf32, #tpu.memory_space<vmem>>, %arg10: memref<1x64xf32, #tpu.memory_space<vmem>>, %arg11: memref<64x4xf32, #tpu.memory_space<vmem>>, %arg12: memref<1x4xf32, #tpu.memory_space<vmem>>, %arg13: memref<8x4xf32, #tpu.memory_space<vmem>>) attributes {dimension_semantics = [#tpu.dimension_semantics<parallel>], iteration_bounds = array<i64: 3>, scalar_prefetch = 0 : i64, scratch_operands = 0 : i64, tpu.core_type = #tpu.core_type<tc>, window_params = [{transform_indices = @transform_0, window_bounds = array<i64: 8, 128>}, {pipeline_mode = #tpu.pipeline_mode<synchronous>, transform_indices = @transform_1, window_bounds = array<i64: 128, 64>}, {pipeline_mode = #tpu.pipeline_mode<synchronous>, transform_indices = @transform_2, window_bounds = array<i64: 1, 64>}, {pipeline_mode = #tpu.pipeline_mode<synchronous>, transform_indices = @transform_3, window_bounds = array<i64: 64, 64>}, {pipeline_mode = #tpu.pipeline_mode<synchronous>, transform_indices = @transform_4, window_bounds = array<i64: 1, 64>}, {pipeline_mode = #tpu.pipeline_mode<synchronous>, transform_indices = @transform_5, window_bounds = array<i64: 128, 16>}, {pipeline_mode = #tpu.pipeline_mode<synchronous>, transform_indices = @transform_6, window_bounds = array<i64: 1, 16>}, {pipeline_mode = #tpu.pipeline_mode<synchronous>, transform_indices = @transform_7, window_bounds = array<i64: 4, 64>}, {pipeline_mode = #tpu.pipeline_mode<synchronous>, transform_indices = @transform_8, window_bounds = array<i64: 64, 64>}, {pipeline_mode = #tpu.pipeline_mode<synchronous>, transform_indices = @transform_9, window_bounds = array<i64: 1, 64>}, {pipeline_mode = #tpu.pipeline_mode<synchronous>, transform_indices = @transform_10, window_bounds = array<i64: 64, 4>}, {pipeline_mode = #tpu.pipeline_mode<synchronous>, transform_indices = @transform_11, window_bounds = array<i64: 1, 4>}, {transform_indices = @transform_12, window_bounds = array<i64: 8, 4>}]} {
    %c0 = arith.constant 0 : index
    %c0_0 = arith.constant 0 : index
    %0 = vector.load %arg1[%c0, %c0_0] : memref<8x128xf32, #tpu.memory_space<vmem>>, vector<8x128xf32>
    %c0_1 = arith.constant 0 : index
    %c0_2 = arith.constant 0 : index
    %1 = vector.load %arg2[%c0_1, %c0_2] : memref<128x64xf32, #tpu.memory_space<vmem>>, vector<128x64xf32>
    %cst = arith.constant dense<0.000000e+00> : vector<8x64xf32>
    %2 = tpu.matmul %0, %1, %cst {dimension_numbers = #tpu.dot_dimension_numbers<[1], [0], [0], [1], [0, 0, 1, 1], [], []>} : vector<8x128xf32>, vector<128x64xf32>, vector<8x64xf32> -> vector<8x64xf32>
    %c0_3 = arith.constant 0 : index
    %c0_4 = arith.constant 0 : index
    %3 = vector.load %arg3[%c0_3, %c0_4] : memref<1x64xf32, #tpu.memory_space<vmem>>, vector<1x64xf32>
    %4 = vector.broadcast %3 : vector<1x64xf32> to vector<8x64xf32>
    %5 = arith.addf %2, %4 : vector<8x64xf32>
    %cst_5 = arith.constant 0.000000e+00 : f32
    %6 = vector.broadcast %cst_5 : f32 to vector<8x64xf32>
    %7 = arith.maximumf %5, %6 : vector<8x64xf32>
    %c0_6 = arith.constant 0 : index
    %c0_7 = arith.constant 0 : index
    %8 = vector.load %arg4[%c0_6, %c0_7] : memref<64x64xf32, #tpu.memory_space<vmem>>, vector<64x64xf32>
    %cst_8 = arith.constant dense<0.000000e+00> : vector<8x64xf32>
    %9 = tpu.matmul %7, %8, %cst_8 {dimension_numbers = #tpu.dot_dimension_numbers<[1], [0], [0], [1], [0, 0, 1, 1], [], []>} : vector<8x64xf32>, vector<64x64xf32>, vector<8x64xf32> -> vector<8x64xf32>
    %c0_9 = arith.constant 0 : index
    %c0_10 = arith.constant 0 : index
    %10 = vector.load %arg5[%c0_9, %c0_10] : memref<1x64xf32, #tpu.memory_space<vmem>>, vector<1x64xf32>
    %11 = vector.broadcast %10 : vector<1x64xf32> to vector<8x64xf32>
    %12 = arith.addf %9, %11 : vector<8x64xf32>
    %c0_11 = arith.constant 0 : index
    %c0_12 = arith.constant 0 : index
    %13 = vector.load %arg6[%c0_11, %c0_12] : memref<128x16xf32, #tpu.memory_space<vmem>>, vector<128x16xf32>
    %cst_13 = arith.constant dense<0.000000e+00> : vector<8x16xf32>
    %14 = tpu.matmul %0, %13, %cst_13 {dimension_numbers = #tpu.dot_dimension_numbers<[1], [0], [0], [1], [0, 0, 1, 1], [], []>} : vector<8x128xf32>, vector<128x16xf32>, vector<8x16xf32> -> vector<8x16xf32>
    %c0_14 = arith.constant 0 : index
    %c0_15 = arith.constant 0 : index
    %15 = vector.load %arg7[%c0_14, %c0_15] : memref<1x16xf32, #tpu.memory_space<vmem>>, vector<1x16xf32>
    %16 = vector.broadcast %15 : vector<1x16xf32> to vector<8x16xf32>
    %17 = arith.addf %14, %16 : vector<8x16xf32>
    %c0_16 = arith.constant 0 : index
    %c0_17 = arith.constant 0 : index
    %18 = vector.load %arg8[%c0_16, %c0_17] : memref<4x64xf32, #tpu.memory_space<vmem>>, vector<4x64xf32>
    %19 = vector.extract_strided_slice %17 {offsets = [0, 0], sizes = [8, 4], strides = [1, 1]} : vector<8x16xf32> to vector<8x4xf32>
    %cst_18 = arith.constant dense<0xFF800000> : vector<8xf32>
    %20 = vector.multi_reduction <maximumf>, %19, %cst_18 [1] : vector<8x4xf32> to vector<8xf32>
    %21 = vector.shape_cast %20 : vector<8xf32> to vector<8x1xf32>
    %22 = vector.broadcast %21 : vector<8x1xf32> to vector<8x4xf32>
    %23 = arith.subf %19, %22 : vector<8x4xf32>
    %24 = math.exp %23 : vector<8x4xf32>
    %cst_19 = arith.constant dense<0.000000e+00> : vector<8xf32>
    %25 = vector.multi_reduction <add>, %24, %cst_19 [1] : vector<8x4xf32> to vector<8xf32>
    %26 = vector.shape_cast %25 : vector<8xf32> to vector<8x1xf32>
    %27 = tpu.reciprocal %26 {approx = true} : vector<8x1xf32> -> vector<8x1xf32>
    %28 = arith.mulf %26, %27 : vector<8x1xf32>
    %cst_20 = arith.constant 2.000000e+00 : f32
    %29 = vector.broadcast %cst_20 : f32 to vector<8x1xf32>
    %30 = arith.subf %29, %28 : vector<8x1xf32>
    %31 = arith.mulf %27, %30 : vector<8x1xf32>
    %32 = vector.broadcast %31 : vector<8x1xf32> to vector<8x4xf32>
    %33 = arith.mulf %24, %32 : vector<8x4xf32>
    %cst_21 = arith.constant dense<0.000000e+00> : vector<8x64xf32>
    %34 = tpu.matmul %33, %18, %cst_21 {dimension_numbers = #tpu.dot_dimension_numbers<[1], [0], [0], [1], [0, 0, 1, 1], [], []>} : vector<8x4xf32>, vector<4x64xf32>, vector<8x64xf32> -> vector<8x64xf32>
    %35 = arith.mulf %34, %12 : vector<8x64xf32>
    %36 = vector.extract_strided_slice %35 {offsets = [0, 0], sizes = [8, 16], strides = [1, 1]} : vector<8x64xf32> to vector<8x16xf32>
    %37 = vector.extract_strided_slice %35 {offsets = [0, 16], sizes = [8, 16], strides = [1, 1]} : vector<8x64xf32> to vector<8x16xf32>
    %38 = arith.addf %36, %37 : vector<8x16xf32>
    %39 = vector.extract_strided_slice %35 {offsets = [0, 32], sizes = [8, 16], strides = [1, 1]} : vector<8x64xf32> to vector<8x16xf32>
    %40 = arith.addf %38, %39 : vector<8x16xf32>
    %41 = vector.extract_strided_slice %35 {offsets = [0, 48], sizes = [8, 16], strides = [1, 1]} : vector<8x64xf32> to vector<8x16xf32>
    %42 = arith.addf %40, %41 : vector<8x16xf32>
    %43 = vector.extract_strided_slice %17 {offsets = [0, 4], sizes = [8, 4], strides = [1, 1]} : vector<8x16xf32> to vector<8x4xf32>
    %cst_22 = arith.constant dense<0xFF800000> : vector<8xf32>
    %44 = vector.multi_reduction <maximumf>, %43, %cst_22 [1] : vector<8x4xf32> to vector<8xf32>
    %45 = vector.shape_cast %44 : vector<8xf32> to vector<8x1xf32>
    %46 = vector.broadcast %45 : vector<8x1xf32> to vector<8x4xf32>
    %47 = arith.subf %43, %46 : vector<8x4xf32>
    %48 = math.exp %47 : vector<8x4xf32>
    %cst_23 = arith.constant dense<0.000000e+00> : vector<8xf32>
    %49 = vector.multi_reduction <add>, %48, %cst_23 [1] : vector<8x4xf32> to vector<8xf32>
    %50 = vector.shape_cast %49 : vector<8xf32> to vector<8x1xf32>
    %51 = tpu.reciprocal %50 {approx = true} : vector<8x1xf32> -> vector<8x1xf32>
    %52 = arith.mulf %50, %51 : vector<8x1xf32>
    %cst_24 = arith.constant 2.000000e+00 : f32
    %53 = vector.broadcast %cst_24 : f32 to vector<8x1xf32>
    %54 = arith.subf %53, %52 : vector<8x1xf32>
    %55 = arith.mulf %51, %54 : vector<8x1xf32>
    %56 = vector.broadcast %55 : vector<8x1xf32> to vector<8x4xf32>
    %57 = arith.mulf %48, %56 : vector<8x4xf32>
    %cst_25 = arith.constant dense<0.000000e+00> : vector<8x64xf32>
    %58 = tpu.matmul %57, %18, %cst_25 {dimension_numbers = #tpu.dot_dimension_numbers<[1], [0], [0], [1], [0, 0, 1, 1], [], []>} : vector<8x4xf32>, vector<4x64xf32>, vector<8x64xf32> -> vector<8x64xf32>
    %59 = arith.mulf %58, %12 : vector<8x64xf32>
    %60 = vector.extract_strided_slice %59 {offsets = [0, 0], sizes = [8, 16], strides = [1, 1]} : vector<8x64xf32> to vector<8x16xf32>
    %61 = vector.extract_strided_slice %59 {offsets = [0, 16], sizes = [8, 16], strides = [1, 1]} : vector<8x64xf32> to vector<8x16xf32>
    %62 = arith.addf %60, %61 : vector<8x16xf32>
    %63 = vector.extract_strided_slice %59 {offsets = [0, 32], sizes = [8, 16], strides = [1, 1]} : vector<8x64xf32> to vector<8x16xf32>
    %64 = arith.addf %62, %63 : vector<8x16xf32>
    %65 = vector.extract_strided_slice %59 {offsets = [0, 48], sizes = [8, 16], strides = [1, 1]} : vector<8x64xf32> to vector<8x16xf32>
    %66 = arith.addf %64, %65 : vector<8x16xf32>
    %67 = vector.extract_strided_slice %17 {offsets = [0, 8], sizes = [8, 4], strides = [1, 1]} : vector<8x16xf32> to vector<8x4xf32>
    %cst_26 = arith.constant dense<0xFF800000> : vector<8xf32>
    %68 = vector.multi_reduction <maximumf>, %67, %cst_26 [1] : vector<8x4xf32> to vector<8xf32>
    %69 = vector.shape_cast %68 : vector<8xf32> to vector<8x1xf32>
    %70 = vector.broadcast %69 : vector<8x1xf32> to vector<8x4xf32>
    %71 = arith.subf %67, %70 : vector<8x4xf32>
    %72 = math.exp %71 : vector<8x4xf32>
    %cst_27 = arith.constant dense<0.000000e+00> : vector<8xf32>
    %73 = vector.multi_reduction <add>, %72, %cst_27 [1] : vector<8x4xf32> to vector<8xf32>
    %74 = vector.shape_cast %73 : vector<8xf32> to vector<8x1xf32>
    %75 = tpu.reciprocal %74 {approx = true} : vector<8x1xf32> -> vector<8x1xf32>
    %76 = arith.mulf %74, %75 : vector<8x1xf32>
    %cst_28 = arith.constant 2.000000e+00 : f32
    %77 = vector.broadcast %cst_28 : f32 to vector<8x1xf32>
    %78 = arith.subf %77, %76 : vector<8x1xf32>
    %79 = arith.mulf %75, %78 : vector<8x1xf32>
    %80 = vector.broadcast %79 : vector<8x1xf32> to vector<8x4xf32>
    %81 = arith.mulf %72, %80 : vector<8x4xf32>
    %cst_29 = arith.constant dense<0.000000e+00> : vector<8x64xf32>
    %82 = tpu.matmul %81, %18, %cst_29 {dimension_numbers = #tpu.dot_dimension_numbers<[1], [0], [0], [1], [0, 0, 1, 1], [], []>} : vector<8x4xf32>, vector<4x64xf32>, vector<8x64xf32> -> vector<8x64xf32>
    %83 = arith.mulf %82, %12 : vector<8x64xf32>
    %84 = vector.extract_strided_slice %83 {offsets = [0, 0], sizes = [8, 16], strides = [1, 1]} : vector<8x64xf32> to vector<8x16xf32>
    %85 = vector.extract_strided_slice %83 {offsets = [0, 16], sizes = [8, 16], strides = [1, 1]} : vector<8x64xf32> to vector<8x16xf32>
    %86 = arith.addf %84, %85 : vector<8x16xf32>
    %87 = vector.extract_strided_slice %83 {offsets = [0, 32], sizes = [8, 16], strides = [1, 1]} : vector<8x64xf32> to vector<8x16xf32>
    %88 = arith.addf %86, %87 : vector<8x16xf32>
    %89 = vector.extract_strided_slice %83 {offsets = [0, 48], sizes = [8, 16], strides = [1, 1]} : vector<8x64xf32> to vector<8x16xf32>
    %90 = arith.addf %88, %89 : vector<8x16xf32>
    %91 = vector.extract_strided_slice %17 {offsets = [0, 12], sizes = [8, 4], strides = [1, 1]} : vector<8x16xf32> to vector<8x4xf32>
    %cst_30 = arith.constant dense<0xFF800000> : vector<8xf32>
    %92 = vector.multi_reduction <maximumf>, %91, %cst_30 [1] : vector<8x4xf32> to vector<8xf32>
    %93 = vector.shape_cast %92 : vector<8xf32> to vector<8x1xf32>
    %94 = vector.broadcast %93 : vector<8x1xf32> to vector<8x4xf32>
    %95 = arith.subf %91, %94 : vector<8x4xf32>
    %96 = math.exp %95 : vector<8x4xf32>
    %cst_31 = arith.constant dense<0.000000e+00> : vector<8xf32>
    %97 = vector.multi_reduction <add>, %96, %cst_31 [1] : vector<8x4xf32> to vector<8xf32>
    %98 = vector.shape_cast %97 : vector<8xf32> to vector<8x1xf32>
    %99 = tpu.reciprocal %98 {approx = true} : vector<8x1xf32> -> vector<8x1xf32>
    %100 = arith.mulf %98, %99 : vector<8x1xf32>
    %cst_32 = arith.constant 2.000000e+00 : f32
    %101 = vector.broadcast %cst_32 : f32 to vector<8x1xf32>
    %102 = arith.subf %101, %100 : vector<8x1xf32>
    %103 = arith.mulf %99, %102 : vector<8x1xf32>
    %104 = vector.broadcast %103 : vector<8x1xf32> to vector<8x4xf32>
    %105 = arith.mulf %96, %104 : vector<8x4xf32>
    %cst_33 = arith.constant dense<0.000000e+00> : vector<8x64xf32>
    %106 = tpu.matmul %105, %18, %cst_33 {dimension_numbers = #tpu.dot_dimension_numbers<[1], [0], [0], [1], [0, 0, 1, 1], [], []>} : vector<8x4xf32>, vector<4x64xf32>, vector<8x64xf32> -> vector<8x64xf32>
    %107 = arith.mulf %106, %12 : vector<8x64xf32>
    %108 = vector.extract_strided_slice %107 {offsets = [0, 0], sizes = [8, 16], strides = [1, 1]} : vector<8x64xf32> to vector<8x16xf32>
    %109 = vector.extract_strided_slice %107 {offsets = [0, 16], sizes = [8, 16], strides = [1, 1]} : vector<8x64xf32> to vector<8x16xf32>
    %110 = arith.addf %108, %109 : vector<8x16xf32>
    %111 = vector.extract_strided_slice %107 {offsets = [0, 32], sizes = [8, 16], strides = [1, 1]} : vector<8x64xf32> to vector<8x16xf32>
    %112 = arith.addf %110, %111 : vector<8x16xf32>
    %113 = vector.extract_strided_slice %107 {offsets = [0, 48], sizes = [8, 16], strides = [1, 1]} : vector<8x64xf32> to vector<8x16xf32>
    %114 = arith.addf %112, %113 : vector<8x16xf32>
    %115 = tpu.concatenate %42, %66, %90, %114 in 1 : vector<8x16xf32>, vector<8x16xf32>, vector<8x16xf32>, vector<8x16xf32> -> vector<8x64xf32>
    %c0_34 = arith.constant 0 : index
    %c0_35 = arith.constant 0 : index
    %116 = vector.load %arg9[%c0_34, %c0_35] : memref<64x64xf32, #tpu.memory_space<vmem>>, vector<64x64xf32>
    %cst_36 = arith.constant dense<0.000000e+00> : vector<8x64xf32>
    %117 = tpu.matmul %115, %116, %cst_36 {dimension_numbers = #tpu.dot_dimension_numbers<[1], [0], [0], [1], [0, 0, 1, 1], [], []>} : vector<8x64xf32>, vector<64x64xf32>, vector<8x64xf32> -> vector<8x64xf32>
    %c0_37 = arith.constant 0 : index
    %c0_38 = arith.constant 0 : index
    %118 = vector.load %arg10[%c0_37, %c0_38] : memref<1x64xf32, #tpu.memory_space<vmem>>, vector<1x64xf32>
    %119 = vector.broadcast %118 : vector<1x64xf32> to vector<8x64xf32>
    %120 = arith.addf %117, %119 : vector<8x64xf32>
    %cst_39 = arith.constant 0.000000e+00 : f32
    %121 = vector.broadcast %cst_39 : f32 to vector<8x64xf32>
    %122 = arith.maximumf %120, %121 : vector<8x64xf32>
    %c0_40 = arith.constant 0 : index
    %c0_41 = arith.constant 0 : index
    %123 = vector.load %arg11[%c0_40, %c0_41] : memref<64x4xf32, #tpu.memory_space<vmem>>, vector<64x4xf32>
    %cst_42 = arith.constant dense<0.000000e+00> : vector<8x4xf32>
    %124 = tpu.matmul %122, %123, %cst_42 {dimension_numbers = #tpu.dot_dimension_numbers<[1], [0], [0], [1], [0, 0, 1, 1], [], []>} : vector<8x64xf32>, vector<64x4xf32>, vector<8x4xf32> -> vector<8x4xf32>
    %c0_43 = arith.constant 0 : index
    %c0_44 = arith.constant 0 : index
    %125 = vector.load %arg12[%c0_43, %c0_44] : memref<1x4xf32, #tpu.memory_space<vmem>>, vector<1x4xf32>
    %126 = vector.broadcast %125 : vector<1x4xf32> to vector<8x4xf32>
    %127 = arith.addf %124, %126 : vector<8x4xf32>
    %128 = arith.negf %127 : vector<8x4xf32>
    %129 = math.exp %128 : vector<8x4xf32>
    %cst_45 = arith.constant 1.000000e+00 : f32
    %130 = vector.broadcast %cst_45 : f32 to vector<8x4xf32>
    %131 = arith.addf %130, %129 : vector<8x4xf32>
    %132 = arith.divf %130, %131 : vector<8x4xf32>
    %c0_46 = arith.constant 0 : index
    %c0_47 = arith.constant 0 : index
    %133 = vector.load %arg13[%c0_46, %c0_47] : memref<8x4xf32, #tpu.memory_space<vmem>>, vector<8x4xf32>
    tpu.vector_store %arg13[%c0_46, %c0_47], %132 {strides = array<i32>} : memref<8x4xf32, #tpu.memory_space<vmem>>, vector<8x4xf32>,
    return
  }
  func.func @transform_0(%arg0: i32) -> (i32, i32) {
    %c0_i32 = arith.constant 0 : i32
    %c0_i32_0 = arith.constant 0 : i32
    return %arg0, %c0_i32 : i32, i32
  }
  func.func @transform_1(%arg0: i32) -> (i32, i32) {
    %c0_i32 = arith.constant 0 : i32
    %c0_i32_0 = arith.constant 0 : i32
    %c0_i32_1 = arith.constant 0 : i32
    return %c0_i32, %c0_i32_0 : i32, i32
  }
  func.func @transform_2(%arg0: i32) -> (i32, i32) {
    %c0_i32 = arith.constant 0 : i32
    %c0_i32_0 = arith.constant 0 : i32
    %c0_i32_1 = arith.constant 0 : i32
    return %c0_i32, %c0_i32_0 : i32, i32
  }
  func.func @transform_3(%arg0: i32) -> (i32, i32) {
    %c0_i32 = arith.constant 0 : i32
    %c0_i32_0 = arith.constant 0 : i32
    %c0_i32_1 = arith.constant 0 : i32
    return %c0_i32, %c0_i32_0 : i32, i32
  }
  func.func @transform_4(%arg0: i32) -> (i32, i32) {
    %c0_i32 = arith.constant 0 : i32
    %c0_i32_0 = arith.constant 0 : i32
    %c0_i32_1 = arith.constant 0 : i32
    return %c0_i32, %c0_i32_0 : i32, i32
  }
  func.func @transform_5(%arg0: i32) -> (i32, i32) {
    %c0_i32 = arith.constant 0 : i32
    %c0_i32_0 = arith.constant 0 : i32
    %c0_i32_1 = arith.constant 0 : i32
    return %c0_i32, %c0_i32_0 : i32, i32
  }
  func.func @transform_6(%arg0: i32) -> (i32, i32) {
    %c0_i32 = arith.constant 0 : i32
    %c0_i32_0 = arith.constant 0 : i32
    %c0_i32_1 = arith.constant 0 : i32
    return %c0_i32, %c0_i32_0 : i32, i32
  }
  func.func @transform_7(%arg0: i32) -> (i32, i32) {
    %c0_i32 = arith.constant 0 : i32
    %c0_i32_0 = arith.constant 0 : i32
    %c0_i32_1 = arith.constant 0 : i32
    return %c0_i32, %c0_i32_0 : i32, i32
  }
  func.func @transform_8(%arg0: i32) -> (i32, i32) {
    %c0_i32 = arith.constant 0 : i32
    %c0_i32_0 = arith.constant 0 : i32
    %c0_i32_1 = arith.constant 0 : i32
    return %c0_i32, %c0_i32_0 : i32, i32
  }
  func.func @transform_9(%arg0: i32) -> (i32, i32) {
    %c0_i32 = arith.constant 0 : i32
    %c0_i32_0 = arith.constant 0 : i32
    %c0_i32_1 = arith.constant 0 : i32
    return %c0_i32, %c0_i32_0 : i32, i32
  }
  func.func @transform_10(%arg0: i32) -> (i32, i32) {
    %c0_i32 = arith.constant 0 : i32
    %c0_i32_0 = arith.constant 0 : i32
    %c0_i32_1 = arith.constant 0 : i32
    return %c0_i32, %c0_i32_0 : i32, i32
  }
  func.func @transform_11(%arg0: i32) -> (i32, i32) {
    %c0_i32 = arith.constant 0 : i32
    %c0_i32_0 = arith.constant 0 : i32
    %c0_i32_1 = arith.constant 0 : i32
    return %c0_i32, %c0_i32_0 : i32, i32
  }
  func.func @transform_12(%arg0: i32) -> (i32, i32) {
    %c0_i32 = arith.constant 0 : i32
    %c0_i32_0 = arith.constant 0 : i32
    return %arg0, %c0_i32 : i32, i32
  }
}

</mosaic_0001>

<llo_original>
// kernel: tpu_custom_call.1
$region0: #{tpu_custom_call.1}
  #allocation0 [shape = 'u32[]', space=smem, size = 0x4, offset = 0x4, fixed_abs, tag = 'smem constant byte address 0x4 - core index']
  #allocation1 [shape = 'u32[144,128]{1,0:T(1,128)}', space=vmem, size = 0x12000, scoped, tag = 'internal scratch']
  %s0 = inlined_call_operand.vmem [shape: f32[24,128], index: 0, kind: input, shape index: {}]
  %s1 = inlined_call_operand.vmem [shape: f32[128,64], index: 1, kind: input, shape index: {}]
  %s2 = inlined_call_operand.vmem [shape: f32[1,64], index: 2, kind: input, shape index: {}]
  %s3 = inlined_call_operand.vmem [shape: f32[64,64], index: 3, kind: input, shape index: {}]
  %s4 = inlined_call_operand.vmem [shape: f32[1,64], index: 4, kind: input, shape index: {}]
  %s5 = inlined_call_operand.vmem [shape: f32[128,16], index: 5, kind: input, shape index: {}]
  %s6 = inlined_call_operand.vmem [shape: f32[1,16], index: 6, kind: input, shape index: {}]
  %s7 = inlined_call_operand.vmem [shape: f32[4,64], index: 7, kind: input, shape index: {}]
  %s8 = inlined_call_operand.vmem [shape: f32[64,64], index: 8, kind: input, shape index: {}]
  %s9 = inlined_call_operand.vmem [shape: f32[1,64], index: 9, kind: input, shape index: {}]
  %s10 = inlined_call_operand.vmem [shape: f32[64,4], index: 10, kind: input, shape index: {}]
  %s11 = inlined_call_operand.vmem [shape: f32[1,4], index: 11, kind: input, shape index: {}]
  %s12 = inlined_call_operand.vmem [shape: f32[24,4], index: 12, kind: output, shape index: {}]
  %s13 = sld [smem:[#allocation0]]
  $region81: #{tpu_custom_call.1} parent=0
    _
  %s15 = ssub.s32 1, %s13
  %s16 = scalar_select 0, %s15, %s13
  loop: start=0, step=1, limit=5
  $region2: #{tpu_custom_call.1} parent=0 // loop_pre_header
    _
  $region3: #{tpu_custom_call.1} parent=0 // loop_header
    %s18 = sphi 0, %s22
    %p19 = scmp.ge.s32.totalorder %s18, 5
    %s28 = sphi 0, %s30
    %s31 = sphi 0, %s28
    %s32 = sphi 0, %s31
    %s48 = sphi 0, %s32
    %s52 = sphi 0, %s52
    %s54 = sphi 0, %s52
    %s55 = sphi 0, %s54
    %s69 = sphi 0, %s55
    %s73 = sphi 0, %s73
    %s75 = sphi 0, %s73
    %s76 = sphi 0, %s75
    %s90 = sphi 0, %s76
    %s94 = sphi 0, %s94
    %s96 = sphi 0, %s94
    %s97 = sphi 0, %s96
    %s111 = sphi 0, %s97
    %s115 = sphi 0, %s115
    %s117 = sphi 0, %s115
    %s118 = sphi 0, %s117
    %s132 = sphi 0, %s118
    %s136 = sphi 0, %s136
    %s138 = sphi 0, %s136
    %s139 = sphi 0, %s138
    %s153 = sphi 0, %s139
    %s157 = sphi 0, %s157
    %s159 = sphi 0, %s157
    %s160 = sphi 0, %s159
    %s174 = sphi 0, %s160
    %s178 = sphi 0, %s178
    %s180 = sphi 0, %s178
    %s181 = sphi 0, %s180
    %s195 = sphi 0, %s181
    %s199 = sphi 0, %s199
    %s201 = sphi 0, %s199
    %s202 = sphi 0, %s201
    %s216 = sphi 0, %s202
    %s220 = sphi 0, %s220
    %s222 = sphi 0, %s220
    %s223 = sphi 0, %s222
    %s237 = sphi 0, %s223
    %s241 = sphi 0, %s241
    %s243 = sphi 0, %s241
    %s244 = sphi 0, %s243
    %s258 = sphi 0, %s244
    %s262 = sphi 0, %s262
    %s264 = sphi 0, %s262
    %s265 = sphi 0, %s264
    %s279 = sphi 0, %s265
    %s285 = sphi 0, %s287
    %s288 = sphi 0, %s285
    %s289 = sphi 0, %s288
    %s305 = sphi 0, %s289
  $region4: #{tpu_custom_call.1} parent=0 // loop_header_branch
    %21 = sbr.rel (%p19) target = $region8
  $region5: #{tpu_custom_call.1} parent=0 // loop_body
    %s23 = ssub.s32 %s18, 1
    %s24 = ssub.s32 %s18, 2
    %s25 = sadd.s32 %s18, 1
    %s26 = ssub.s32 %s18, %s25
    %p27 = scmp.eq.s32.totalorder %s26, 0
    %s29 = sadd.s32 %s28, 1
    %s30 = scalar_select %p27, %s28, %s29
    %p33 = pneg %p27
    %p34 = scmp.eq.s32.totalorder %s18, 2
    %p35 = por %p33, %p34
    %p36 = scmp.ne.s32.totalorder %s28, %s31
    %p37 = scmp.eq.s32.totalorder %s18, 0
    %p38 = por %p36, %p37
    %p39 = scmp.ne.s32.totalorder %s28, %s31
    %p40 = scmp.eq.s32.totalorder %s23, 2
    %p41 = por %p39, %p40
    %p42 = scmp.ne.s32.totalorder %s31, %s32
    %p43 = scmp.eq.s32.totalorder %s23, 0
    %p44 = por %p42, %p43
    %p45 = scmp.ne.s32.totalorder %s31, %s32
    %p46 = scmp.eq.s32.totalorder %s24, 2
    %p47 = por %p45, %p46
    %p49 = scmp.ne.s32.totalorder %s32, %s48
    %p50 = scmp.eq.s32.totalorder %s24, 0
    %p51 = por %p49, %p50
    %s53 = sadd.s32 %s52, 1
    %p56 = scmp.eq.s32.totalorder %s18, 2
    %p57 = scmp.ne.s32.totalorder %s52, %s54
    %p58 = scmp.eq.s32.totalorder %s18, 0
    %p59 = por %p57, %p58
    %p60 = scmp.ne.s32.totalorder %s52, %s54
    %p61 = scmp.eq.s32.totalorder %s23, 2
    %p62 = por %p60, %p61
    %p63 = scmp.ne.s32.totalorder %s54, %s55
    %p64 = scmp.eq.s32.totalorder %s23, 0
    %p65 = por %p63, %p64
    %p66 = scmp.ne.s32.totalorder %s54, %s55
    %p67 = scmp.eq.s32.totalorder %s24, 2
    %p68 = por %p66, %p67
    %p70 = scmp.ne.s32.totalorder %s55, %s69
    %p71 = scmp.eq.s32.totalorder %s24, 0
    %p72 = por %p70, %p71
    %s74 = sadd.s32 %s73, 1
    %p77 = scmp.eq.s32.totalorder %s18, 2
    %p78 = scmp.ne.s32.totalorder %s73, %s75
    %p79 = scmp.eq.s32.totalorder %s18, 0
    %p80 = por %p78, %p79
    %p81 = scmp.ne.s32.totalorder %s73, %s75
    %p82 = scmp.eq.s32.totalorder %s23, 2
    %p83 = por %p81, %p82
    %p84 = scmp.ne.s32.totalorder %s75, %s76
    %p85 = scmp.eq.s32.totalorder %s23, 0
    %p86 = por %p84, %p85
    %p87 = scmp.ne.s32.totalorder %s75, %s76
    %p88 = scmp.eq.s32.totalorder %s24, 2
    %p89 = por %p87, %p88
    %p91 = scmp.ne.s32.totalorder %s76, %s90
    %p92 = scmp.eq.s32.totalorder %s24, 0
    %p93 = por %p91, %p92
    %s95 = sadd.s32 %s94, 1
    %p98 = scmp.eq.s32.totalorder %s18, 2
    %p99 = scmp.ne.s32.totalorder %s94, %s96
    %p100 = scmp.eq.s32.totalorder %s18, 0
    %p101 = por %p99, %p100
    %p102 = scmp.ne.s32.totalorder %s94, %s96
    %p103 = scmp.eq.s32.totalorder %s23, 2
    %p104 = por %p102, %p103
    %p105 = scmp.ne.s32.totalorder %s96, %s97
    %p106 = scmp.eq.s32.totalorder %s23, 0
    %p107 = por %p105, %p106
    %p108 = scmp.ne.s32.totalorder %s96, %s97
    %p109 = scmp.eq.s32.totalorder %s24, 2
    %p110 = por %p108, %p109
    %p112 = scmp.ne.s32.totalorder %s97, %s111
    %p113 = scmp.eq.s32.totalorder %s24, 0
    %p114 = por %p112, %p113
    %s116 = sadd.s32 %s115, 1
    %p119 = scmp.eq.s32.totalorder %s18, 2
    %p120 = scmp.ne.s32.totalorder %s115, %s117
    %p121 = scmp.eq.s32.totalorder %s18, 0
    %p122 = por %p120, %p121
    %p123 = scmp.ne.s32.totalorder %s115, %s117
    %p124 = scmp.eq.s32.totalorder %s23, 2
    %p125 = por %p123, %p124
    %p126 = scmp.ne.s32.totalorder %s117, %s118
    %p127 = scmp.eq.s32.totalorder %s23, 0
    %p128 = por %p126, %p127
    %p129 = scmp.ne.s32.totalorder %s117, %s118
    %p130 = scmp.eq.s32.totalorder %s24, 2
    %p131 = por %p129, %p130
    %p133 = scmp.ne.s32.totalorder %s118, %s132
    %p134 = scmp.eq.s32.totalorder %s24, 0
    %p135 = por %p133, %p134
    %s137 = sadd.s32 %s136, 1
    %p140 = scmp.eq.s32.totalorder %s18, 2
    %p141 = scmp.ne.s32.totalorder %s136, %s138
    %p142 = scmp.eq.s32.totalorder %s18, 0
    %p143 = por %p141, %p142
    %p144 = scmp.ne.s32.totalorder %s136, %s138
    %p145 = scmp.eq.s32.totalorder %s23, 2
    %p146 = por %p144, %p145
    %p147 = scmp.ne.s32.totalorder %s138, %s139
    %p148 = scmp.eq.s32.totalorder %s23, 0
    %p149 = por %p147, %p148
    %p150 = scmp.ne.s32.totalorder %s138, %s139
    %p151 = scmp.eq.s32.totalorder %s24, 2
    %p152 = por %p150, %p151
    %p154 = scmp.ne.s32.totalorder %s139, %s153
    %p155 = scmp.eq.s32.totalorder %s24, 0
    %p156 = por %p154, %p155
    %s158 = sadd.s32 %s157, 1
    %p161 = scmp.eq.s32.totalorder %s18, 2
    %p162 = scmp.ne.s32.totalorder %s157, %s159
    %p163 = scmp.eq.s32.totalorder %s18, 0
    %p164 = por %p162, %p163
    %p165 = scmp.ne.s32.totalorder %s157, %s159
    %p166 = scmp.eq.s32.totalorder %s23, 2
    %p167 = por %p165, %p166
    %p168 = scmp.ne.s32.totalorder %s159, %s160
    %p169 = scmp.eq.s32.totalorder %s23, 0
    %p170 = por %p168, %p169
    %p171 = scmp.ne.s32.totalorder %s159, %s160
    %p172 = scmp.eq.s32.totalorder %s24, 2
    %p173 = por %p171, %p172
    %p175 = scmp.ne.s32.totalorder %s160, %s174
    %p176 = scmp.eq.s32.totalorder %s24, 0
    %p177 = por %p175, %p176
    %s179 = sadd.s32 %s178, 1
    %p182 = scmp.eq.s32.totalorder %s18, 2
    %p183 = scmp.ne.s32.totalorder %s178, %s180
    %p184 = scmp.eq.s32.totalorder %s18, 0
    %p185 = por %p183, %p184
    %p186 = scmp.ne.s32.totalorder %s178, %s180
    %p187 = scmp.eq.s32.totalorder %s23, 2
    %p188 = por %p186, %p187
    %p189 = scmp.ne.s32.totalorder %s180, %s181
    %p190 = scmp.eq.s32.totalorder %s23, 0
    %p191 = por %p189, %p190
    %p192 = scmp.ne.s32.totalorder %s180, %s181
    %p193 = scmp.eq.s32.totalorder %s24, 2
    %p194 = por %p192, %p193
    %p196 = scmp.ne.s32.totalorder %s181, %s195
    %p197 = scmp.eq.s32.totalorder %s24, 0
    %p198 = por %p196, %p197
    %s200 = sadd.s32 %s199, 1
    %p203 = scmp.eq.s32.totalorder %s18, 2
    %p204 = scmp.ne.s32.totalorder %s199, %s201
    %p205 = scmp.eq.s32.totalorder %s18, 0
    %p206 = por %p204, %p205
    %p207 = scmp.ne.s32.totalorder %s199, %s201
    %p208 = scmp.eq.s32.totalorder %s23, 2
    %p209 = por %p207, %p208
    %p210 = scmp.ne.s32.totalorder %s201, %s202
    %p211 = scmp.eq.s32.totalorder %s23, 0
    %p212 = por %p210, %p211
    %p213 = scmp.ne.s32.totalorder %s201, %s202
    %p214 = scmp.eq.s32.totalorder %s24, 2
    %p215 = por %p213, %p214
    %p217 = scmp.ne.s32.totalorder %s202, %s216
    %p218 = scmp.eq.s32.totalorder %s24, 0
    %p219 = por %p217, %p218
    %s221 = sadd.s32 %s220, 1
    %p224 = scmp.eq.s32.totalorder %s18, 2
    %p225 = scmp.ne.s32.totalorder %s220, %s222
    %p226 = scmp.eq.s32.totalorder %s18, 0
    %p227 = por %p225, %p226
    %p228 = scmp.ne.s32.totalorder %s220, %s222
    %p229 = scmp.eq.s32.totalorder %s23, 2
    %p230 = por %p228, %p229
    %p231 = scmp.ne.s32.totalorder %s222, %s223
    %p232 = scmp.eq.s32.totalorder %s23, 0
    %p233 = por %p231, %p232
    %p234 = scmp.ne.s32.totalorder %s222, %s223
    %p235 = scmp.eq.s32.totalorder %s24, 2
    %p236 = por %p234, %p235
    %p238 = scmp.ne.s32.totalorder %s223, %s237
    %p239 = scmp.eq.s32.totalorder %s24, 0
    %p240 = por %p238, %p239
    %s242 = sadd.s32 %s241, 1
    %p245 = scmp.eq.s32.totalorder %s18, 2
    %p246 = scmp.ne.s32.totalorder %s241, %s243
    %p247 = scmp.eq.s32.totalorder %s18, 0
    %p248 = por %p246, %p247
    %p249 = scmp.ne.s32.totalorder %s241, %s243
    %p250 = scmp.eq.s32.totalorder %s23, 2
    %p251 = por %p249, %p250
    %p252 = scmp.ne.s32.totalorder %s243, %s244
    %p253 = scmp.eq.s32.totalorder %s23, 0
    %p254 = por %p252, %p253
    %p255 = scmp.ne.s32.totalorder %s243, %s244
    %p256 = scmp.eq.s32.totalorder %s24, 2
    %p257 = por %p255, %p256
    %p259 = scmp.ne.s32.totalorder %s244, %s258
    %p260 = scmp.eq.s32.totalorder %s24, 0
    %p261 = por %p259, %p260
    %s263 = sadd.s32 %s262, 1
    %p266 = scmp.eq.s32.totalorder %s18, 2
    %p267 = scmp.ne.s32.totalorder %s262, %s264
    %p268 = scmp.eq.s32.totalorder %s18, 0
    %p269 = por %p267, %p268
    %p270 = scmp.ne.s32.totalorder %s262, %s264
    %p271 = scmp.eq.s32.totalorder %s23, 2
    %p272 = por %p270, %p271
    %p273 = scmp.ne.s32.totalorder %s264, %s265
    %p274 = scmp.eq.s32.totalorder %s23, 0
    %p275 = por %p273, %p274
    %p276 = scmp.ne.s32.totalorder %s264, %s265
    %p277 = scmp.eq.s32.totalorder %s24, 2
    %p278 = por %p276, %p277
    %p280 = scmp.ne.s32.totalorder %s265, %s279
    %p281 = scmp.eq.s32.totalorder %s24, 0
    %p282 = por %p280, %p281
    %s283 = ssub.s32 %s18, %s25
    %p284 = scmp.eq.s32.totalorder %s283, 0
    %s286 = sadd.s32 %s285, 1
    %s287 = scalar_select %p284, %s285, %s286
    %p290 = pneg %p284
    %p291 = scmp.eq.s32.totalorder %s18, 2
    %p292 = por %p290, %p291
    %p293 = scmp.ne.s32.totalorder %s285, %s288
    %p294 = scmp.eq.s32.totalorder %s18, 0
    %p295 = por %p293, %p294
    %p296 = scmp.ne.s32.totalorder %s285, %s288
    %p297 = scmp.eq.s32.totalorder %s23, 2
    %p298 = por %p296, %p297
    %p299 = scmp.ne.s32.totalorder %s288, %s289
    %p300 = scmp.eq.s32.totalorder %s23, 0
    %p301 = por %p299, %p300
    %p302 = scmp.ne.s32.totalorder %s288, %s289
    %p303 = scmp.eq.s32.totalorder %s24, 2
    %p304 = por %p302, %p303
    %p306 = scmp.ne.s32.totalorder %s289, %s305
    %p307 = scmp.eq.s32.totalorder %s24, 0
    %p308 = por %p306, %p307
    %p309 = scmp.le.s32.totalorder 1, %s18
    %p310 = scmp.lt.s32.totalorder %s18, 4
    %p311 = pnand %p309, %p310
    %p312 = pneg %p311
    // Predicated region
    $region9: #{tpu_custom_call.1} parent=5 // pred_check
      _
    $region10: #{tpu_custom_call.1} parent=5 // pred_check_branch
      %314 = sbr.rel (%p311) target = $region12
    $region11: #{tpu_custom_call.1} parent=5 // pred_region
      %s315 = ssub.s32 %s18, 1
      // Predicated region
      $region13: #{tpu_custom_call.1} parent=11 // pred_check
        %p316 = pneg %p65
      $region14: #{tpu_custom_call.1} parent=11 // pred_check_branch
        %318 = sbr.rel (%p316) target = $region16
      $region15: #{tpu_custom_call.1} parent=11 // pred_region
        _
      $region16: #{tpu_custom_call.1} parent=11 // pred_fallthru
        _
      // Predicated region
      $region17: #{tpu_custom_call.1} parent=11 // pred_check
        %p319 = pneg %p86
      $region18: #{tpu_custom_call.1} parent=11 // pred_check_branch
        %321 = sbr.rel (%p319) target = $region20
      $region19: #{tpu_custom_call.1} parent=11 // pred_region
        _
      $region20: #{tpu_custom_call.1} parent=11 // pred_fallthru
        _
      // Predicated region
      $region21: #{tpu_custom_call.1} parent=11 // pred_check
        %p322 = pneg %p107
      $region22: #{tpu_custom_call.1} parent=11 // pred_check_branch
        %324 = sbr.rel (%p322) target = $region24
      $region23: #{tpu_custom_call.1} parent=11 // pred_region
        _
      $region24: #{tpu_custom_call.1} parent=11 // pred_fallthru
        _
      // Predicated region
      $region25: #{tpu_custom_call.1} parent=11 // pred_check
        %p325 = pneg %p128
      $region26: #{tpu_custom_call.1} parent=11 // pred_check_branch
        %327 = sbr.rel (%p325) target = $region28
      $region27: #{tpu_custom_call.1} parent=11 // pred_region
        _
      $region28: #{tpu_custom_call.1} parent=11 // pred_fallthru
        _
      // Predicated region
      $region29: #{tpu_custom_call.1} parent=11 // pred_check
        %p328 = pneg %p149
      $region30: #{tpu_custom_call.1} parent=11 // pred_check_branch
        %330 = sbr.rel (%p328) target = $region32
      $region31: #{tpu_custom_call.1} parent=11 // pred_region
        _
      $region32: #{tpu_custom_call.1} parent=11 // pred_fallthru
        _
      // Predicated region
      $region33: #{tpu_custom_call.1} parent=11 // pred_check
        %p331 = pneg %p170
      $region34: #{tpu_custom_call.1} parent=11 // pred_check_branch
        %333 = sbr.rel (%p331) target = $region36
      $region35: #{tpu_custom_call.1} parent=11 // pred_region
        _
      $region36: #{tpu_custom_call.1} parent=11 // pred_fallthru
        _
      // Predicated region
      $region37: #{tpu_custom_call.1} parent=11 // pred_check
        %p334 = pneg %p191
      $region38: #{tpu_custom_call.1} parent=11 // pred_check_branch
        %336 = sbr.rel (%p334) target = $region40
      $region39: #{tpu_custom_call.1} parent=11 // pred_region
        _
      $region40: #{tpu_custom_call.1} parent=11 // pred_fallthru
        _
      // Predicated region
      $region41: #{tpu_custom_call.1} parent=11 // pred_check
        %p337 = pneg %p212
      $region42: #{tpu_custom_call.1} parent=11 // pred_check_branch
        %339 = sbr.rel (%p337) target = $region44
      $region43: #{tpu_custom_call.1} parent=11 // pred_region
        _
      $region44: #{tpu_custom_call.1} parent=11 // pred_fallthru
        _
      // Predicated region
      $region45: #{tpu_custom_call.1} parent=11 // pred_check
        %p340 = pneg %p233
      $region46: #{tpu_custom_call.1} parent=11 // pred_check_branch
        %342 = sbr.rel (%p340) target = $region48
      $region47: #{tpu_custom_call.1} parent=11 // pred_region
        _
      $region48: #{tpu_custom_call.1} parent=11 // pred_fallthru
        _
      // Predicated region
      $region49: #{tpu_custom_call.1} parent=11 // pred_check
        %p343 = pneg %p254
      $region50: #{tpu_custom_call.1} parent=11 // pred_check_branch
        %345 = sbr.rel (%p343) target = $region52
      $region51: #{tpu_custom_call.1} parent=11 // pred_region
        _
      $region52: #{tpu_custom_call.1} parent=11 // pred_fallthru
        _
      // Predicated region
      $region53: #{tpu_custom_call.1} parent=11 // pred_check
        %p346 = pneg %p275
      $region54: #{tpu_custom_call.1} parent=11 // pred_check_branch
        %348 = sbr.rel (%p346) target = $region56
      $region55: #{tpu_custom_call.1} parent=11 // pred_region
        _
      $region56: #{tpu_custom_call.1} parent=11 // pred_fallthru
        _
    $region12: #{tpu_custom_call.1} parent=5 // pred_fallthru
      _
    %p349 = scmp.lt.s32.totalorder %s18, 3
    // Predicated region
    $region57: #{tpu_custom_call.1} parent=5 // pred_check
      %p350 = pneg %p349
    $region58: #{tpu_custom_call.1} parent=5 // pred_check_branch
      %352 = sbr.rel (%p350) target = $region60
    $region59: #{tpu_custom_call.1} parent=5 // pred_region
      // Predicated region
      $region61: #{tpu_custom_call.1} parent=59 // pred_check
        %p353 = pneg %p38
      $region62: #{tpu_custom_call.1} parent=59 // pred_check_branch
        %355 = sbr.rel (%p353) target = $region64
      $region63: #{tpu_custom_call.1} parent=59 // pred_region
        %p356 = scmp.lt.s32.totalorder %s18, 2
        %s357 = scalar_select %p356, %s18, 2
        %s358 = smul.addr %s357, 8
        %s359 = scalar_lea.vmem %s0, %s358
      $region64: #{tpu_custom_call.1} parent=59 // pred_fallthru
        _
    $region60: #{tpu_custom_call.1} parent=5 // pred_fallthru
      _
    %p360 = scmp.le.s32.totalorder 1, %s18
    %p361 = scmp.lt.s32.totalorder %s18, 4
    %p362 = pnand %p360, %p361
    %p363 = pneg %p362
    // Predicated region
    $region65: #{tpu_custom_call.1} parent=5 // pred_check
      _
    $region66: #{tpu_custom_call.1} parent=5 // pred_check_branch
      %365 = sbr.rel (%p362) target = $region68
    $region67: #{tpu_custom_call.1} parent=5 // pred_region
      %s366 = ssub.s32 %s18, 1
      %p367 = scmp.lt.s32.totalorder %s23, 2
      %s368 = scalar_select %p367, %s23, 2
      %s369 = smul.addr %s368, 8
      %s370 = scalar_lea.vmem %s0, %s369
      %p371 = pneg %p44
      %p372 = pneg %p41
      %p373 = pneg %p65
      %p374 = pneg %p62
      %p375 = pneg %p86
      %p376 = pneg %p83
      %p377 = pneg %p107
      %p378 = pneg %p104
      %p379 = pneg %p128
      %p380 = pneg %p125
      %p381 = pneg %p149
      %p382 = pneg %p146
      %p383 = pneg %p170
      %p384 = pneg %p167
      %p385 = pneg %p191
      %p386 = pneg %p188
      %p387 = pneg %p212
      %p388 = pneg %p209
      %p389 = pneg %p233
      %p390 = pneg %p230
      %p391 = pneg %p254
      %p392 = pneg %p251
      %p393 = pneg %p275
      %p394 = pneg %p272
      %p395 = pneg %p301
      %p396 = pneg %p298
      %p397 = scmp.lt.s32.totalorder %s23, 2
      %s398 = scalar_select %p397, %s23, 2
      %s399 = smul.addr %s398, 8
      %s400 = scalar_lea.vmem %s12, %s399
      %p401 = scmp.lt.s32.totalorder %s23, 2
      %s402 = scalar_select %p401, %s23, 2
      %s403 = smul.addr %s402, 8
      %s404 = scalar_lea.vmem %s0, %s403
      %p405 = scmp.lt.s32.totalorder %s23, 2
      %s406 = scalar_select %p405, %s23, 2
      %s407 = smul.addr %s406, 8
      %s408 = scalar_lea.vmem %s12, %s407
      %v409 = vld [vmem:[%s404] sm:$0xff]
      %v410 = vld [vmem:[%s1] sm:$0xff]
      %v411 = vld [vmem:[%s1 + $0x8] sm:$0xff]
      %v412 = vld [vmem:[%s1 + $0x10] sm:$0xff]
      %v413 = vld [vmem:[%s1 + $0x18] sm:$0xff]
      %v414 = vld [vmem:[%s1 + $0x20] sm:$0xff]
      %v415 = vld [vmem:[%s1 + $0x28] sm:$0xff]
      %v416 = vld [vmem:[%s1 + $0x30] sm:$0xff]
      %v417 = vld [vmem:[%s1 + $0x38] sm:$0xff]
      %v418 = vld [vmem:[%s1 + $0x40] sm:$0xff]
      %v419 = vld [vmem:[%s1 + $0x48] sm:$0xff]
      %v420 = vld [vmem:[%s1 + $0x50] sm:$0xff]
      %v421 = vld [vmem:[%s1 + $0x58] sm:$0xff]
      %v422 = vld [vmem:[%s1 + $0x60] sm:$0xff]
      %v423 = vld [vmem:[%s1 + $0x68] sm:$0xff]
      %v424 = vld [vmem:[%s1 + $0x70] sm:$0xff]
      %v425 = vld [vmem:[%s1 + $0x78] sm:$0xff]
      %v426 = vld [vmem:[%s2] sm:$0x1]
      %v428 = vlaneseq
      %v429 = vshrl.u32 %v428, 7
      %v430 = vsub.s32 0, %v429
      %v431 = vrot.slane %v426, %v430
      %433 = vmatprep.subr.mxu0 0.0
      %434 = vmatpush1.msra.mxu0 %v410
      %435 = vmatprep.subr.mxu0 0.0
      %436 = vmatpush1.msra.mxu0 %v411
      %437 = vmatprep.subr.mxu0 0.0
      %438 = vmatpush1.msra.mxu0 %v412
      %439 = vmatprep.subr.mxu0 0.0
      %440 = vmatpush1.msra.mxu0 %v413
      %441 = vmatprep.subr.mxu0 0.0
      %442 = vmatpush1.msra.mxu0 %v414
      %443 = vmatprep.subr.mxu0 0.0
      %444 = vmatpush1.msra.mxu0 %v415
      %445 = vmatprep.subr.mxu0 0.0
      %446 = vmatpush1.msra.mxu0 %v416
      %447 = vmatprep.subr.mxu0 0.0
      %448 = vmatpush1.msra.mxu0 %v417
      %449 = vmatprep.subr.mxu0 0.0
      %450 = vmatpush1.msra.mxu0 %v418
      %451 = vmatprep.subr.mxu0 0.0
      %452 = vmatpush1.msra.mxu0 %v419
      %453 = vmatprep.subr.mxu0 0.0
      %454 = vmatpush1.msra.mxu0 %v420
      %455 = vmatprep.subr.mxu0 0.0
      %456 = vmatpush1.msra.mxu0 %v421
      %457 = vmatprep.subr.mxu0 0.0
      %458 = vmatpush1.msra.mxu0 %v422
      %459 = vmatprep.subr.mxu0 0.0
      %460 = vmatpush1.msra.mxu0 %v423
      %461 = vmatprep.subr.mxu0 0.0
      %462 = vmatpush1.msra.mxu0 %v424
      %463 = vmatprep.subr.mxu0 0.0
      %464 = vmatpush1.msra.mxu0 %v425
      %465 = vmatprep.subr.mxu0 0.0
      %466 = vmatpush1.msra.mxu0 0.0
      %467 = vmatprep.subr.mxu0 0.0
      %468 = vmatpush1.msra.mxu0 0.0
      %469 = vmatprep.subr.mxu0 0.0
      %470 = vmatpush1.msra.mxu0 0.0
      %471 = vmatprep.subr.mxu0 0.0
      %472 = vmatpush1.msra.mxu0 0.0
      %473 = vmatprep.subr.mxu0 0.0
      %474 = vmatpush1.msra.mxu0 0.0
      %475 = vmatprep.subr.mxu0 0.0
      %476 = vmatpush1.msra.mxu0 0.0
      %477 = vmatprep.subr.mxu0 0.0
      %478 = vmatpush1.msra.mxu0 0.0
      %479 = vmatprep.subr.mxu0 0.0
      %480 = vmatpush1.msra.mxu0 0.0
      %481 = vmatprep.subr.mxu0 0.0
      %482 = vmatpush1.msra.mxu0 0.0
      %483 = vmatprep.subr.mxu0 0.0
      %484 = vmatpush1.msra.mxu0 0.0
      %485 = vmatprep.subr.mxu0 0.0
      %486 = vmatpush1.msra.mxu0 0.0
      %487 = vmatprep.subr.mxu0 0.0
      %488 = vmatpush1.msra.mxu0 0.0
      %489 = vmatprep.subr.mxu0 0.0
      %490 = vmatpush1.msra.mxu0 0.0
      %491 = vmatprep.subr.mxu0 0.0
      %492 = vmatpush1.msra.mxu0 0.0
      %493 = vmatprep.subr.mxu0 0.0
      %494 = vmatpush1.msra.mxu0 0.0
      %495 = vmatprep.subr.mxu0 0.0
      %496 = vmatpush1.msra.mxu0 0.0
      %497 = vmatprep.mubr.f32.mxu0 0.0
      %498 = vmatmul.mubr.f32.gmra.mrb[0].mxu0 %v409
      %v499 = vpop.f32.mrb[0].mxu0
      %v500 = vadd.f32 %v431, %v499
      %v501 = vpop.f32.mrb[0].mxu0
      %502 = vdwg.mxu0
      %v503 = vmax.f32 %v500, 0.0
      %v504 = vld [vmem:[%s3] sm:$0xff]
      %v505 = vld [vmem:[%s3 + $0x8] sm:$0xff]
      %v506 = vld [vmem:[%s3 + $0x10] sm:$0xff]
      %v507 = vld [vmem:[%s3 + $0x18] sm:$0xff]
      %v508 = vld [vmem:[%s3 + $0x20] sm:$0xff]
      %v509 = vld [vmem:[%s3 + $0x28] sm:$0xff]
      %v510 = vld [vmem:[%s3 + $0x30] sm:$0xff]
      %v511 = vld [vmem:[%s3 + $0x38] sm:$0xff]
      %v512 = vld [vmem:[%s4] sm:$0x1]
      %v514 = vlaneseq
      %v515 = vshrl.u32 %v514, 7
      %v516 = vsub.s32 0, %v515
      %v517 = vrot.slane %v512, %v516
      %vm519 = vcmask 523264
      %v521 = vsel %vm519, %v503, 0
      %523 = vmatprep.subr.mxu0 0.0
      %524 = vmatpush1.msra.mxu0 %v504
      %525 = vmatprep.subr.mxu0 0.0
      %526 = vmatpush1.msra.mxu0 %v505
      %527 = vmatprep.subr.mxu0 0.0
      %528 = vmatpush1.msra.mxu0 %v506
      %529 = vmatprep.subr.mxu0 0.0
      %530 = vmatpush1.msra.mxu0 %v507
      %531 = vmatprep.subr.mxu0 0.0
      %532 = vmatpush1.msra.mxu0 %v508
      %533 = vmatprep.subr.mxu0 0.0
      %534 = vmatpush1.msra.mxu0 %v509
      %535 = vmatprep.subr.mxu0 0.0
      %536 = vmatpush1.msra.mxu0 %v510
      %537 = vmatprep.subr.mxu0 0.0
      %538 = vmatpush1.msra.mxu0 %v511
      %539 = vmatprep.subr.mxu0 0.0
      %540 = vmatpush1.msra.mxu0 0.0
      %541 = vmatprep.subr.mxu0 0.0
      %542 = vmatpush1.msra.mxu0 0.0
      %543 = vmatprep.subr.mxu0 0.0
      %544 = vmatpush1.msra.mxu0 0.0
      %545 = vmatprep.subr.mxu0 0.0
      %546 = vmatpush1.msra.mxu0 0.0
      %547 = vmatprep.subr.mxu0 0.0
      %548 = vmatpush1.msra.mxu0 0.0
      %549 = vmatprep.subr.mxu0 0.0
      %550 = vmatpush1.msra.mxu0 0.0
      %551 = vmatprep.subr.mxu0 0.0
      %552 = vmatpush1.msra.mxu0 0.0
      %553 = vmatprep.subr.mxu0 0.0
      %554 = vmatpush1.msra.mxu0 0.0
      %555 = vmatprep.subr.mxu0 0.0
      %556 = vmatpush1.msra.mxu0 0.0
      %557 = vmatprep.subr.mxu0 0.0
      %558 = vmatpush1.msra.mxu0 0.0
      %559 = vmatprep.subr.mxu0 0.0
      %560 = vmatpush1.msra.mxu0 0.0
      %561 = vmatprep.subr.mxu0 0.0
      %562 = vmatpush1.msra.mxu0 0.0
      %563 = vmatprep.subr.mxu0 0.0
      %564 = vmatpush1.msra.mxu0 0.0
      %565 = vmatprep.subr.mxu0 0.0
      %566 = vmatpush1.msra.mxu0 0.0
      %567 = vmatprep.subr.mxu0 0.0
      %568 = vmatpush1.msra.mxu0 0.0
      %569 = vmatprep.subr.mxu0 0.0
      %570 = vmatpush1.msra.mxu0 0.0
      %571 = vmatprep.subr.mxu0 0.0
      %572 = vmatpush1.msra.mxu0 0.0
      %573 = vmatprep.subr.mxu0 0.0
      %574 = vmatpush1.msra.mxu0 0.0
      %575 = vmatprep.subr.mxu0 0.0
      %576 = vmatpush1.msra.mxu0 0.0
      %577 = vmatprep.subr.mxu0 0.0
      %578 = vmatpush1.msra.mxu0 0.0
      %579 = vmatprep.subr.mxu0 0.0
      %580 = vmatpush1.msra.mxu0 0.0
      %581 = vmatprep.subr.mxu0 0.0
      %582 = vmatpush1.msra.mxu0 0.0
      %583 = vmatprep.subr.mxu0 0.0
      %584 = vmatpush1.msra.mxu0 0.0
      %585 = vmatprep.subr.mxu0 0.0
      %586 = vmatpush1.msra.mxu0 0.0
      %587 = vmatprep.mubr.f32.mxu0 0.0
      %588 = vmatmul.mubr.f32.gmra.mrb[0].mxu0 %v521
      %v589 = vpop.f32.mrb[0].mxu0
      %v590 = vadd.f32 %v517, %v589
      %v591 = vpop.f32.mrb[0].mxu0
      %592 = vdwg.mxu0
      %v593 = vld [vmem:[%s5] sm:$0xff]
      %v594 = vld [vmem:[%s5 + $0x8] sm:$0xff]
      %v595 = vld [vmem:[%s5 + $0x10] sm:$0xff]
      %v596 = vld [vmem:[%s5 + $0x18] sm:$0xff]
      %v597 = vld [vmem:[%s5 + $0x20] sm:$0xff]
      %v598 = vld [vmem:[%s5 + $0x28] sm:$0xff]
      %v599 = vld [vmem:[%s5 + $0x30] sm:$0xff]
      %v600 = vld [vmem:[%s5 + $0x38] sm:$0xff]
      %v601 = vld [vmem:[%s5 + $0x40] sm:$0xff]
      %v602 = vld [vmem:[%s5 + $0x48] sm:$0xff]
      %v603 = vld [vmem:[%s5 + $0x50] sm:$0xff]
      %v604 = vld [vmem:[%s5 + $0x58] sm:$0xff]
      %v605 = vld [vmem:[%s5 + $0x60] sm:$0xff]
      %v606 = vld [vmem:[%s5 + $0x68] sm:$0xff]
      %v607 = vld [vmem:[%s5 + $0x70] sm:$0xff]
      %v608 = vld [vmem:[%s5 + $0x78] sm:$0xff]
      %v609 = vld [vmem:[%s6] sm:$0x1]
      %v611 = vlaneseq
      %v612 = vshrl.u32 %v611, 7
      %v613 = vsub.s32 0, %v612
      %v614 = vrot.slane %v609, %v613
      %616 = vmatprep.subr.mxu0 0.0
      %617 = vmatpush1.msra.mxu0 %v593
      %618 = vmatprep.subr.mxu0 0.0
      %619 = vmatpush1.msra.mxu0 %v594
      %620 = vmatprep.subr.mxu0 0.0
      %621 = vmatpush1.msra.mxu0 %v595
      %622 = vmatprep.subr.mxu0 0.0
      %623 = vmatpush1.msra.mxu0 %v596
      %624 = vmatprep.subr.mxu0 0.0
      %625 = vmatpush1.msra.mxu0 %v597
      %626 = vmatprep.subr.mxu0 0.0
      %627 = vmatpush1.msra.mxu0 %v598
      %628 = vmatprep.subr.mxu0 0.0
      %629 = vmatpush1.msra.mxu0 %v599
      %630 = vmatprep.subr.mxu0 0.0
      %631 = vmatpush1.msra.mxu0 %v600
      %632 = vmatprep.subr.mxu0 0.0
      %633 = vmatpush1.msra.mxu0 %v601
      %634 = vmatprep.subr.mxu0 0.0
      %635 = vmatpush1.msra.mxu0 %v602
      %636 = vmatprep.subr.mxu0 0.0
      %637 = vmatpush1.msra.mxu0 %v603
      %638 = vmatprep.subr.mxu0 0.0
      %639 = vmatpush1.msra.mxu0 %v604
      %640 = vmatprep.subr.mxu0 0.0
      %641 = vmatpush1.msra.mxu0 %v605
      %642 = vmatprep.subr.mxu0 0.0
      %643 = vmatpush1.msra.mxu0 %v606
      %644 = vmatprep.subr.mxu0 0.0
      %645 = vmatpush1.msra.mxu0 %v607
      %646 = vmatprep.subr.mxu0 0.0
      %647 = vmatpush1.msra.mxu0 %v608
      %648 = vmatprep.subr.mxu0 0.0
      %649 = vmatpush1.msra.mxu0 0.0
      %650 = vmatprep.subr.mxu0 0.0
      %651 = vmatpush1.msra.mxu0 0.0
      %652 = vmatprep.subr.mxu0 0.0
      %653 = vmatpush1.msra.mxu0 0.0
      %654 = vmatprep.subr.mxu0 0.0
      %655 = vmatpush1.msra.mxu0 0.0
      %656 = vmatprep.subr.mxu0 0.0
      %657 = vmatpush1.msra.mxu0 0.0
      %658 = vmatprep.subr.mxu0 0.0
      %659 = vmatpush1.msra.mxu0 0.0
      %660 = vmatprep.subr.mxu0 0.0
      %661 = vmatpush1.msra.mxu0 0.0
      %662 = vmatprep.subr.mxu0 0.0
      %663 = vmatpush1.msra.mxu0 0.0
      %664 = vmatprep.subr.mxu0 0.0
      %665 = vmatpush1.msra.mxu0 0.0
      %666 = vmatprep.subr.mxu0 0.0
      %667 = vmatpush1.msra.mxu0 0.0
      %668 = vmatprep.subr.mxu0 0.0
      %669 = vmatpush1.msra.mxu0 0.0
      %670 = vmatprep.subr.mxu0 0.0
      %671 = vmatpush1.msra.mxu0 0.0
      %672 = vmatprep.subr.mxu0 0.0
      %673 = vmatpush1.msra.mxu0 0.0
      %674 = vmatprep.subr.mxu0 0.0
      %675 = vmatpush1.msra.mxu0 0.0
      %676 = vmatprep.subr.mxu0 0.0
      %677 = vmatpush1.msra.mxu0 0.0
      %678 = vmatprep.subr.mxu0 0.0
      %679 = vmatpush1.msra.mxu0 0.0
      %680 = vmatprep.mubr.f32.mxu0 0.0
      %681 = vmatmul.mubr.f32.gmra.mrb[0].mxu0 %v409
      %v682 = vpop.f32.mrb[0].mxu0
      %v683 = vadd.f32 %v614, %v682
      %v684 = vpop.f32.mrb[0].mxu0
      %685 = vdwg.mxu0
      %v686 = vld [vmem:[%s7] sm:$0xf]
      %vm687 = vcmask 31744
      %v688 = vsel %vm687, %v683, -inf
      %689 = vmax.xlane.f32.xlu0 %v688
      %v690 = vpop.xlane.xlu0 %689
      %v691 = vsub.f32 %v683, %v690
      %v692 = vmul.f32 %v691, 1.442695
      %v693 = vpow.pop %v692
      %v694 = vsel %vm687, %v693, 0.0
      %695 = vadd.xlane.f32.xlu0 %v694
      %v696 = vpop.xlane.xlu0 %695
      %v697 = vrcp.pop %v696
      %v698 = vmul.f32 %v696, %v697
      %v699 = vsub.f32 2.0, %v698
      %v700 = vmul.f32 %v697, %v699
      %v701 = vmul.f32 %v693, %v700
      %v703 = vsel %vm687, %v701, 0
      %vm705 = vcmask 1043456
      %v707 = vsel %vm705, %v686, 0
      %709 = vmatprep.subr.mxu0 0.0
      %710 = vmatpush1.msra.mxu0 %v707
      %711 = vmatprep.subr.mxu0 0.0
      %712 = vmatpush1.msra.mxu0 0.0
      %713 = vmatprep.subr.mxu0 0.0
      %714 = vmatpush1.msra.mxu0 0.0
      %715 = vmatprep.subr.mxu0 0.0
      %716 = vmatpush1.msra.mxu0 0.0
      %717 = vmatprep.subr.mxu0 0.0
      %718 = vmatpush1.msra.mxu0 0.0
      %719 = vmatprep.subr.mxu0 0.0
      %720 = vmatpush1.msra.mxu0 0.0
      %721 = vmatprep.subr.mxu0 0.0
      %722 = vmatpush1.msra.mxu0 0.0
      %723 = vmatprep.subr.mxu0 0.0
      %724 = vmatpush1.msra.mxu0 0.0
      %725 = vmatprep.subr.mxu0 0.0
      %726 = vmatpush1.msra.mxu0 0.0
      %727 = vmatprep.subr.mxu0 0.0
      %728 = vmatpush1.msra.mxu0 0.0
      %729 = vmatprep.subr.mxu0 0.0
      %730 = vmatpush1.msra.mxu0 0.0
      %731 = vmatprep.subr.mxu0 0.0
      %732 = vmatpush1.msra.mxu0 0.0
      %733 = vmatprep.subr.mxu0 0.0
      %734 = vmatpush1.msra.mxu0 0.0
      %735 = vmatprep.subr.mxu0 0.0
      %736 = vmatpush1.msra.mxu0 0.0
      %737 = vmatprep.subr.mxu0 0.0
      %738 = vmatpush1.msra.mxu0 0.0
      %739 = vmatprep.subr.mxu0 0.0
      %740 = vmatpush1.msra.mxu0 0.0
      %741 = vmatprep.subr.mxu0 0.0
      %742 = vmatpush1.msra.mxu0 0.0
      %743 = vmatprep.subr.mxu0 0.0
      %744 = vmatpush1.msra.mxu0 0.0
      %745 = vmatprep.subr.mxu0 0.0
      %746 = vmatpush1.msra.mxu0 0.0
      %747 = vmatprep.subr.mxu0 0.0
      %748 = vmatpush1.msra.mxu0 0.0
      %749 = vmatprep.subr.mxu0 0.0
      %750 = vmatpush1.msra.mxu0 0.0
      %751 = vmatprep.subr.mxu0 0.0
      %752 = vmatpush1.msra.mxu0 0.0
      %753 = vmatprep.subr.mxu0 0.0
      %754 = vmatpush1.msra.mxu0 0.0
      %755 = vmatprep.subr.mxu0 0.0
      %756 = vmatpush1.msra.mxu0 0.0
      %757 = vmatprep.subr.mxu0 0.0
      %758 = vmatpush1.msra.mxu0 0.0
      %759 = vmatprep.subr.mxu0 0.0
      %760 = vmatpush1.msra.mxu0 0.0
      %761 = vmatprep.subr.mxu0 0.0
      %762 = vmatpush1.msra.mxu0 0.0
      %763 = vmatprep.subr.mxu0 0.0
      %764 = vmatpush1.msra.mxu0 0.0
      %765 = vmatprep.subr.mxu0 0.0
      %766 = vmatpush1.msra.mxu0 0.0
      %767 = vmatprep.subr.mxu0 0.0
      %768 = vmatpush1.msra.mxu0 0.0
      %769 = vmatprep.subr.mxu0 0.0
      %770 = vmatpush1.msra.mxu0 0.0
      %771 = vmatprep.subr.mxu0 0.0
      %772 = vmatpush1.msra.mxu0 0.0
      %773 = vmatprep.mubr.f32.mxu0 0.0
      %774 = vmatmul.mubr.f32.gmra.mrb[0].mxu0 %v703
      %v775 = vpop.f32.mrb[0].mxu0
      %v776 = vadd.f32 0.0, %v775
      %v777 = vpop.f32.mrb[0].mxu0
      %778 = vdwg.mxu0
      %v779 = vmul.f32 %v776, %v590
      %781 = vrot.lane.b32.xlu0 %v779, 112
      %v782 = vpop.permute.xlu0 %781
      %v784 = vadd.f32 %v779, %v782
      %785 = vrot.lane.b32.xlu0 %v779, 96
      %v786 = vpop.permute.xlu0 %785
      %v788 = vadd.f32 %v784, %v786
      %789 = vrot.lane.b32.xlu0 %v779, 80
      %v790 = vpop.permute.xlu0 %789
      %v792 = vadd.f32 %v788, %v790
      %vm793 = vcmask 64544
      %v794 = vsel %vm793, %v683, -inf
      %795 = vmax.xlane.f32.xlu0 %v794
      %v796 = vpop.xlane.xlu0 %795
      %v797 = vsub.f32 %v683, %v796
      %v798 = vmul.f32 %v797, 1.442695
      %v799 = vpow.pop %v798
      %801 = vrot.lane.b32.xlu0 %v799, 124
      %v802 = vpop.permute.xlu0 %801
      %v804 = vsel %vm687, %v802, 0.0
      %805 = vadd.xlane.f32.xlu0 %v804
      %v806 = vpop.xlane.xlu0 %805
      %v807 = vrcp.pop %v806
      %v808 = vmul.f32 %v806, %v807
      %v809 = vsub.f32 2.0, %v808
      %v810 = vmul.f32 %v807, %v809
      %v811 = vmul.f32 %v799, %v810
      %813 = vrot.lane.b32.xlu0 %v811, 124
      %v814 = vpop.permute.xlu0 %813
      %v815 = vsel %vm687, %v814, 0
      %817 = vmatprep.subr.mxu0 0.0
      %818 = vmatpush1.msra.mxu0 %v707
      %819 = vmatprep.subr.mxu0 0.0
      %820 = vmatpush1.msra.mxu0 0.0
      %821 = vmatprep.subr.mxu0 0.0
      %822 = vmatpush1.msra.mxu0 0.0
      %823 = vmatprep.subr.mxu0 0.0
      %824 = vmatpush1.msra.mxu0 0.0
      %825 = vmatprep.subr.mxu0 0.0
      %826 = vmatpush1.msra.mxu0 0.0
      %827 = vmatprep.subr.mxu0 0.0
      %828 = vmatpush1.msra.mxu0 0.0
      %829 = vmatprep.subr.mxu0 0.0
      %830 = vmatpush1.msra.mxu0 0.0
      %831 = vmatprep.subr.mxu0 0.0
      %832 = vmatpush1.msra.mxu0 0.0
      %833 = vmatprep.subr.mxu0 0.0
      %834 = vmatpush1.msra.mxu0 0.0
      %835 = vmatprep.subr.mxu0 0.0
      %836 = vmatpush1.msra.mxu0 0.0
      %837 = vmatprep.subr.mxu0 0.0
      %838 = vmatpush1.msra.mxu0 0.0
      %839 = vmatprep.subr.mxu0 0.0
      %840 = vmatpush1.msra.mxu0 0.0
      %841 = vmatprep.subr.mxu0 0.0
      %842 = vmatpush1.msra.mxu0 0.0
      %843 = vmatprep.subr.mxu0 0.0
      %844 = vmatpush1.msra.mxu0 0.0
      %845 = vmatprep.subr.mxu0 0.0
      %846 = vmatpush1.msra.mxu0 0.0
      %847 = vmatprep.subr.mxu0 0.0
      %848 = vmatpush1.msra.mxu0 0.0
      %849 = vmatprep.subr.mxu0 0.0
      %850 = vmatpush1.msra.mxu0 0.0
      %851 = vmatprep.subr.mxu0 0.0
      %852 = vmatpush1.msra.mxu0 0.0
      %853 = vmatprep.subr.mxu0 0.0
      %854 = vmatpush1.msra.mxu0 0.0
      %855 = vmatprep.subr.mxu0 0.0
      %856 = vmatpush1.msra.mxu0 0.0
      %857 = vmatprep.subr.mxu0 0.0
      %858 = vmatpush1.msra.mxu0 0.0
      %859 = vmatprep.subr.mxu0 0.0
      %860 = vmatpush1.msra.mxu0 0.0
      %861 = vmatprep.subr.mxu0 0.0
      %862 = vmatpush1.msra.mxu0 0.0
      %863 = vmatprep.subr.mxu0 0.0
      %864 = vmatpush1.msra.mxu0 0.0
      %865 = vmatprep.subr.mxu0 0.0
      %866 = vmatpush1.msra.mxu0 0.0
      %867 = vmatprep.subr.mxu0 0.0
      %868 = vmatpush1.msra.mxu0 0.0
      %869 = vmatprep.subr.mxu0 0.0
      %870 = vmatpush1.msra.mxu0 0.0
      %871 = vmatprep.subr.mxu0 0.0
      %872 = vmatpush1.msra.mxu0 0.0
      %873 = vmatprep.subr.mxu0 0.0
      %874 = vmatpush1.msra.mxu0 0.0
      %875 = vmatprep.subr.mxu0 0.0
      %876 = vmatpush1.msra.mxu0 0.0
      %877 = vmatprep.subr.mxu0 0.0
      %878 = vmatpush1.msra.mxu0 0.0
      %879 = vmatprep.subr.mxu0 0.0
      %880 = vmatpush1.msra.mxu0 0.0
      %881 = vmatprep.mubr.f32.mxu0 0.0
      %882 = vmatmul.mubr.f32.gmra.mrb[0].mxu0 %v815
      %v883 = vpop.f32.mrb[0].mxu0
      %v884 = vadd.f32 0.0, %v883
      %v885 = vpop.f32.mrb[0].mxu0
      %886 = vdwg.mxu0
      %v887 = vmul.f32 %v884, %v590
      %889 = vrot.lane.b32.xlu0 %v887, 112
      %v890 = vpop.permute.xlu0 %889
      %v892 = vadd.f32 %v887, %v890
      %893 = vrot.lane.b32.xlu0 %v887, 96
      %v894 = vpop.permute.xlu0 %893
      %v896 = vadd.f32 %v892, %v894
      %897 = vrot.lane.b32.xlu0 %v887, 80
      %v898 = vpop.permute.xlu0 %897
      %v900 = vadd.f32 %v896, %v898
      %vm901 = vcmask 97344
      %v902 = vsel %vm901, %v683, -inf
      %903 = vmax.xlane.f32.xlu0 %v902
      %v904 = vpop.xlane.xlu0 %903
      %v905 = vsub.f32 %v683, %v904
      %v906 = vmul.f32 %v905, 1.442695
      %v907 = vpow.pop %v906
      %909 = vrot.lane.b32.xlu0 %v907, 120
      %v910 = vpop.permute.xlu0 %909
      %v912 = vsel %vm687, %v910, 0.0
      %913 = vadd.xlane.f32.xlu0 %v912
      %v914 = vpop.xlane.xlu0 %913
      %v915 = vrcp.pop %v914
      %v916 = vmul.f32 %v914, %v915
      %v917 = vsub.f32 2.0, %v916
      %v918 = vmul.f32 %v915, %v917
      %v919 = vmul.f32 %v907, %v918
      %921 = vrot.lane.b32.xlu0 %v919, 120
      %v922 = vpop.permute.xlu0 %921
      %v923 = vsel %vm687, %v922, 0
      %925 = vmatprep.subr.mxu0 0.0
      %926 = vmatpush1.msra.mxu0 %v707
      %927 = vmatprep.subr.mxu0 0.0
      %928 = vmatpush1.msra.mxu0 0.0
      %929 = vmatprep.subr.mxu0 0.0
      %930 = vmatpush1.msra.mxu0 0.0
      %931 = vmatprep.subr.mxu0 0.0
      %932 = vmatpush1.msra.mxu0 0.0
      %933 = vmatprep.subr.mxu0 0.0
      %934 = vmatpush1.msra.mxu0 0.0
      %935 = vmatprep.subr.mxu0 0.0
      %936 = vmatpush1.msra.mxu0 0.0
      %937 = vmatprep.subr.mxu0 0.0
      %938 = vmatpush1.msra.mxu0 0.0
      %939 = vmatprep.subr.mxu0 0.0
      %940 = vmatpush1.msra.mxu0 0.0
      %941 = vmatprep.subr.mxu0 0.0
      %942 = vmatpush1.msra.mxu0 0.0
      %943 = vmatprep.subr.mxu0 0.0
      %944 = vmatpush1.msra.mxu0 0.0
      %945 = vmatprep.subr.mxu0 0.0
      %946 = vmatpush1.msra.mxu0 0.0
      %947 = vmatprep.subr.mxu0 0.0
      %948 = vmatpush1.msra.mxu0 0.0
      %949 = vmatprep.subr.mxu0 0.0
      %950 = vmatpush1.msra.mxu0 0.0
      %951 = vmatprep.subr.mxu0 0.0
      %952 = vmatpush1.msra.mxu0 0.0
      %953 = vmatprep.subr.mxu0 0.0
      %954 = vmatpush1.msra.mxu0 0.0
      %955 = vmatprep.subr.mxu0 0.0
      %956 = vmatpush1.msra.mxu0 0.0
      %957 = vmatprep.subr.mxu0 0.0
      %958 = vmatpush1.msra.mxu0 0.0
      %959 = vmatprep.subr.mxu0 0.0
      %960 = vmatpush1.msra.mxu0 0.0
      %961 = vmatprep.subr.mxu0 0.0
      %962 = vmatpush1.msra.mxu0 0.0
      %963 = vmatprep.subr.mxu0 0.0
      %964 = vmatpush1.msra.mxu0 0.0
      %965 = vmatprep.subr.mxu0 0.0
      %966 = vmatpush1.msra.mxu0 0.0
      %967 = vmatprep.subr.mxu0 0.0
      %968 = vmatpush1.msra.mxu0 0.0
      %969 = vmatprep.subr.mxu0 0.0
      %970 = vmatpush1.msra.mxu0 0.0
      %971 = vmatprep.subr.mxu0 0.0
      %972 = vmatpush1.msra.mxu0 0.0
      %973 = vmatprep.subr.mxu0 0.0
      %974 = vmatpush1.msra.mxu0 0.0
      %975 = vmatprep.subr.mxu0 0.0
      %976 = vmatpush1.msra.mxu0 0.0
      %977 = vmatprep.subr.mxu0 0.0
      %978 = vmatpush1.msra.mxu0 0.0
      %979 = vmatprep.subr.mxu0 0.0
      %980 = vmatpush1.msra.mxu0 0.0
      %981 = vmatprep.subr.mxu0 0.0
      %982 = vmatpush1.msra.mxu0 0.0
      %983 = vmatprep.subr.mxu0 0.0
      %984 = vmatpush1.msra.mxu0 0.0
      %985 = vmatprep.subr.mxu0 0.0
      %986 = vmatpush1.msra.mxu0 0.0
      %987 = vmatprep.subr.mxu0 0.0
      %988 = vmatpush1.msra.mxu0 0.0
      %989 = vmatprep.mubr.f32.mxu0 0.0
      %990 = vmatmul.mubr.f32.gmra.mrb[0].mxu0 %v923
      %v991 = vpop.f32.mrb[0].mxu0
      %v992 = vadd.f32 0.0, %v991
      %v993 = vpop.f32.mrb[0].mxu0
      %994 = vdwg.mxu0
      %v995 = vmul.f32 %v992, %v590
      %997 = vrot.lane.b32.xlu0 %v995, 112
      %v998 = vpop.permute.xlu0 %997
      %v1000 = vadd.f32 %v995, %v998
      %1001 = vrot.lane.b32.xlu0 %v995, 96
      %v1002 = vpop.permute.xlu0 %1001
      %v1004 = vadd.f32 %v1000, %v1002
      %1005 = vrot.lane.b32.xlu0 %v995, 80
      %v1006 = vpop.permute.xlu0 %1005
      %v1008 = vadd.f32 %v1004, %v1006
      %vm1009 = vcmask 130144
      %v1010 = vsel %vm1009, %v683, -inf
      %1011 = vmax.xlane.f32.xlu0 %v1010
      %v1012 = vpop.xlane.xlu0 %1011
      %v1013 = vsub.f32 %v683, %v1012
      %v1014 = vmul.f32 %v1013, 1.442695
      %v1015 = vpow.pop %v1014
      %1017 = vrot.lane.b32.xlu0 %v1015, 116
      %v1018 = vpop.permute.xlu0 %1017
      %v1020 = vsel %vm687, %v1018, 0.0
      %1021 = vadd.xlane.f32.xlu0 %v1020
      %v1022 = vpop.xlane.xlu0 %1021
      %v1023 = vrcp.pop %v1022
      %v1024 = vmul.f32 %v1022, %v1023
      %v1025 = vsub.f32 2.0, %v1024
      %v1026 = vmul.f32 %v1023, %v1025
      %v1027 = vmul.f32 %v1015, %v1026
      %1029 = vrot.lane.b32.xlu0 %v1027, 116
      %v1030 = vpop.permute.xlu0 %1029
      %v1031 = vsel %vm687, %v1030, 0
      %1033 = vmatprep.subr.mxu0 0.0
      %1034 = vmatpush1.msra.mxu0 %v707
      %1035 = vmatprep.subr.mxu0 0.0
      %1036 = vmatpush1.msra.mxu0 0.0
      %1037 = vmatprep.subr.mxu0 0.0
      %1038 = vmatpush1.msra.mxu0 0.0
      %1039 = vmatprep.subr.mxu0 0.0
      %1040 = vmatpush1.msra.mxu0 0.0
      %1041 = vmatprep.subr.mxu0 0.0
      %1042 = vmatpush1.msra.mxu0 0.0
      %1043 = vmatprep.subr.mxu0 0.0
      %1044 = vmatpush1.msra.mxu0 0.0
      %1045 = vmatprep.subr.mxu0 0.0
      %1046 = vmatpush1.msra.mxu0 0.0
      %1047 = vmatprep.subr.mxu0 0.0
      %1048 = vmatpush1.msra.mxu0 0.0
      %1049 = vmatprep.subr.mxu0 0.0
      %1050 = vmatpush1.msra.mxu0 0.0
      %1051 = vmatprep.subr.mxu0 0.0
      %1052 = vmatpush1.msra.mxu0 0.0
      %1053 = vmatprep.subr.mxu0 0.0
      %1054 = vmatpush1.msra.mxu0 0.0
      %1055 = vmatprep.subr.mxu0 0.0
      %1056 = vmatpush1.msra.mxu0 0.0
      %1057 = vmatprep.subr.mxu0 0.0
      %1058 = vmatpush1.msra.mxu0 0.0
      %1059 = vmatprep.subr.mxu0 0.0
      %1060 = vmatpush1.msra.mxu0 0.0
      %1061 = vmatprep.subr.mxu0 0.0
      %1062 = vmatpush1.msra.mxu0 0.0
      %1063 = vmatprep.subr.mxu0 0.0
      %1064 = vmatpush1.msra.mxu0 0.0
      %1065 = vmatprep.subr.mxu0 0.0
      %1066 = vmatpush1.msra.mxu0 0.0
      %1067 = vmatprep.subr.mxu0 0.0
      %1068 = vmatpush1.msra.mxu0 0.0
      %1069 = vmatprep.subr.mxu0 0.0
      %1070 = vmatpush1.msra.mxu0 0.0
      %1071 = vmatprep.subr.mxu0 0.0
      %1072 = vmatpush1.msra.mxu0 0.0
      %1073 = vmatprep.subr.mxu0 0.0
      %1074 = vmatpush1.msra.mxu0 0.0
      %1075 = vmatprep.subr.mxu0 0.0
      %1076 = vmatpush1.msra.mxu0 0.0
      %1077 = vmatprep.subr.mxu0 0.0
      %1078 = vmatpush1.msra.mxu0 0.0
      %1079 = vmatprep.subr.mxu0 0.0
      %1080 = vmatpush1.msra.mxu0 0.0
      %1081 = vmatprep.subr.mxu0 0.0
      %1082 = vmatpush1.msra.mxu0 0.0
      %1083 = vmatprep.subr.mxu0 0.0
      %1084 = vmatpush1.msra.mxu0 0.0
      %1085 = vmatprep.subr.mxu0 0.0
      %1086 = vmatpush1.msra.mxu0 0.0
      %1087 = vmatprep.subr.mxu0 0.0
      %1088 = vmatpush1.msra.mxu0 0.0
      %1089 = vmatprep.subr.mxu0 0.0
      %1090 = vmatpush1.msra.mxu0 0.0
      %1091 = vmatprep.subr.mxu0 0.0
      %1092 = vmatpush1.msra.mxu0 0.0
      %1093 = vmatprep.subr.mxu0 0.0
      %1094 = vmatpush1.msra.mxu0 0.0
      %1095 = vmatprep.subr.mxu0 0.0
      %1096 = vmatpush1.msra.mxu0 0.0
      %1097 = vmatprep.mubr.f32.mxu0 0.0
      %1098 = vmatmul.mubr.f32.gmra.mrb[0].mxu0 %v1031
      %v1099 = vpop.f32.mrb[0].mxu0
      %v1100 = vadd.f32 0.0, %v1099
      %v1101 = vpop.f32.mrb[0].mxu0
      %1102 = vdwg.mxu0
      %v1103 = vmul.f32 %v1100, %v590
      %1105 = vrot.lane.b32.xlu0 %v1103, 112
      %v1106 = vpop.permute.xlu0 %1105
      %v1108 = vadd.f32 %v1103, %v1106
      %1109 = vrot.lane.b32.xlu0 %v1103, 96
      %v1110 = vpop.permute.xlu0 %1109
      %v1112 = vadd.f32 %v1108, %v1110
      %1113 = vrot.lane.b32.xlu0 %v1103, 80
      %v1114 = vpop.permute.xlu0 %1113
      %v1116 = vadd.f32 %v1112, %v1114
      %1118 = vrot.lane.b32.xlu0 %v900, 16
      %v1119 = vpop.permute.xlu0 %1118
      %1122 = vrot.lane.b32.xlu0 %v1008, 32
      %v1123 = vpop.permute.xlu0 %1122
      %1126 = vrot.lane.b32.xlu0 %v1116, 48
      %v1127 = vpop.permute.xlu0 %1126
      %vm1129 = vcmask 130048
      %v1130 = vsel %vm1129, %v792, %v1119
      %vm1131 = vcmask 261120
      %v1132 = vsel %vm1131, %v1130, %v1123
      %vm1133 = vcmask 392192
      %v1134 = vsel %vm1133, %v1132, %v1127
      %v1135 = vld [vmem:[%s8] sm:$0xff]
      %v1136 = vld [vmem:[%s8 + $0x8] sm:$0xff]
      %v1137 = vld [vmem:[%s8 + $0x10] sm:$0xff]
      %v1138 = vld [vmem:[%s8 + $0x18] sm:$0xff]
      %v1139 = vld [vmem:[%s8 + $0x20] sm:$0xff]
      %v1140 = vld [vmem:[%s8 + $0x28] sm:$0xff]
      %v1141 = vld [vmem:[%s8 + $0x30] sm:$0xff]
      %v1142 = vld [vmem:[%s8 + $0x38] sm:$0xff]
      %v1143 = vld [vmem:[%s9] sm:$0x1]
      %v1145 = vlaneseq
      %v1146 = vshrl.u32 %v1145, 7
      %v1147 = vsub.s32 0, %v1146
      %v1148 = vrot.slane %v1143, %v1147
      %v1151 = vsel %vm519, %v1134, 0
      %1153 = vmatprep.subr.mxu0 0.0
      %1154 = vmatpush1.msra.mxu0 %v1135
      %1155 = vmatprep.subr.mxu0 0.0
      %1156 = vmatpush1.msra.mxu0 %v1136
      %1157 = vmatprep.subr.mxu0 0.0
      %1158 = vmatpush1.msra.mxu0 %v1137
      %1159 = vmatprep.subr.mxu0 0.0
      %1160 = vmatpush1.msra.mxu0 %v1138
      %1161 = vmatprep.subr.mxu0 0.0
      %1162 = vmatpush1.msra.mxu0 %v1139
      %1163 = vmatprep.subr.mxu0 0.0
      %1164 = vmatpush1.msra.mxu0 %v1140
      %1165 = vmatprep.subr.mxu0 0.0
      %1166 = vmatpush1.msra.mxu0 %v1141
      %1167 = vmatprep.subr.mxu0 0.0
      %1168 = vmatpush1.msra.mxu0 %v1142
      %1169 = vmatprep.subr.mxu0 0.0
      %1170 = vmatpush1.msra.mxu0 0.0
      %1171 = vmatprep.subr.mxu0 0.0
      %1172 = vmatpush1.msra.mxu0 0.0
      %1173 = vmatprep.subr.mxu0 0.0
      %1174 = vmatpush1.msra.mxu0 0.0
      %1175 = vmatprep.subr.mxu0 0.0
      %1176 = vmatpush1.msra.mxu0 0.0
      %1177 = vmatprep.subr.mxu0 0.0
      %1178 = vmatpush1.msra.mxu0 0.0
      %1179 = vmatprep.subr.mxu0 0.0
      %1180 = vmatpush1.msra.mxu0 0.0
      %1181 = vmatprep.subr.mxu0 0.0
      %1182 = vmatpush1.msra.mxu0 0.0
      %1183 = vmatprep.subr.mxu0 0.0
      %1184 = vmatpush1.msra.mxu0 0.0
      %1185 = vmatprep.subr.mxu0 0.0
      %1186 = vmatpush1.msra.mxu0 0.0
      %1187 = vmatprep.subr.mxu0 0.0
      %1188 = vmatpush1.msra.mxu0 0.0
      %1189 = vmatprep.subr.mxu0 0.0
      %1190 = vmatpush1.msra.mxu0 0.0
      %1191 = vmatprep.subr.mxu0 0.0
      %1192 = vmatpush1.msra.mxu0 0.0
      %1193 = vmatprep.subr.mxu0 0.0
      %1194 = vmatpush1.msra.mxu0 0.0
      %1195 = vmatprep.subr.mxu0 0.0
      %1196 = vmatpush1.msra.mxu0 0.0
      %1197 = vmatprep.subr.mxu0 0.0
      %1198 = vmatpush1.msra.mxu0 0.0
      %1199 = vmatprep.subr.mxu0 0.0
      %1200 = vmatpush1.msra.mxu0 0.0
      %1201 = vmatprep.subr.mxu0 0.0
      %1202 = vmatpush1.msra.mxu0 0.0
      %1203 = vmatprep.subr.mxu0 0.0
      %1204 = vmatpush1.msra.mxu0 0.0
      %1205 = vmatprep.subr.mxu0 0.0
      %1206 = vmatpush1.msra.mxu0 0.0
      %1207 = vmatprep.subr.mxu0 0.0
      %1208 = vmatpush1.msra.mxu0 0.0
      %1209 = vmatprep.subr.mxu0 0.0
      %1210 = vmatpush1.msra.mxu0 0.0
      %1211 = vmatprep.subr.mxu0 0.0
      %1212 = vmatpush1.msra.mxu0 0.0
      %1213 = vmatprep.subr.mxu0 0.0
      %1214 = vmatpush1.msra.mxu0 0.0
      %1215 = vmatprep.subr.mxu0 0.0
      %1216 = vmatpush1.msra.mxu0 0.0
      %1217 = vmatprep.mubr.f32.mxu0 0.0
      %1218 = vmatmul.mubr.f32.gmra.mrb[0].mxu0 %v1151
      %v1219 = vpop.f32.mrb[0].mxu0
      %v1220 = vadd.f32 %v1148, %v1219
      %v1221 = vpop.f32.mrb[0].mxu0
      %1222 = vdwg.mxu0
      %v1223 = vmax.f32 %v1220, 0.0
      %v1224 = vld [vmem:[%s10] sm:$0xff]
      %v1225 = vld [vmem:[%s10 + $0x8] sm:$0xff]
      %v1226 = vld [vmem:[%s10 + $0x10] sm:$0xff]
      %v1227 = vld [vmem:[%s10 + $0x18] sm:$0xff]
      %v1228 = vld [vmem:[%s10 + $0x20] sm:$0xff]
      %v1229 = vld [vmem:[%s10 + $0x28] sm:$0xff]
      %v1230 = vld [vmem:[%s10 + $0x30] sm:$0xff]
      %v1231 = vld [vmem:[%s10 + $0x38] sm:$0xff]
      %v1232 = vld [vmem:[%s11] sm:$0x1]
      %v1234 = vlaneseq
      %v1235 = vshrl.u32 %v1234, 7
      %v1236 = vsub.s32 0, %v1235
      %v1237 = vrot.slane %v1232, %v1236
      %v1240 = vsel %vm519, %v1223, 0
      %1242 = vmatprep.subr.mxu0 0.0
      %1243 = vmatpush1.msra.mxu0 %v1224
      %1244 = vmatprep.subr.mxu0 0.0
      %1245 = vmatpush1.msra.mxu0 %v1225
      %1246 = vmatprep.subr.mxu0 0.0
      %1247 = vmatpush1.msra.mxu0 %v1226
      %1248 = vmatprep.subr.mxu0 0.0
      %1249 = vmatpush1.msra.mxu0 %v1227
      %1250 = vmatprep.subr.mxu0 0.0
      %1251 = vmatpush1.msra.mxu0 %v1228
      %1252 = vmatprep.subr.mxu0 0.0
      %1253 = vmatpush1.msra.mxu0 %v1229
      %1254 = vmatprep.subr.mxu0 0.0
      %1255 = vmatpush1.msra.mxu0 %v1230
      %1256 = vmatprep.subr.mxu0 0.0
      %1257 = vmatpush1.msra.mxu0 %v1231
      %1258 = vmatprep.subr.mxu0 0.0
      %1259 = vmatpush1.msra.mxu0 0.0
      %1260 = vmatprep.subr.mxu0 0.0
      %1261 = vmatpush1.msra.mxu0 0.0
      %1262 = vmatprep.subr.mxu0 0.0
      %1263 = vmatpush1.msra.mxu0 0.0
      %1264 = vmatprep.subr.mxu0 0.0
      %1265 = vmatpush1.msra.mxu0 0.0
      %1266 = vmatprep.subr.mxu0 0.0
      %1267 = vmatpush1.msra.mxu0 0.0
      %1268 = vmatprep.subr.mxu0 0.0
      %1269 = vmatpush1.msra.mxu0 0.0
      %1270 = vmatprep.subr.mxu0 0.0
      %1271 = vmatpush1.msra.mxu0 0.0
      %1272 = vmatprep.subr.mxu0 0.0
      %1273 = vmatpush1.msra.mxu0 0.0
      %1274 = vmatprep.subr.mxu0 0.0
      %1275 = vmatpush1.msra.mxu0 0.0
      %1276 = vmatprep.subr.mxu0 0.0
      %1277 = vmatpush1.msra.mxu0 0.0
      %1278 = vmatprep.subr.mxu0 0.0
      %1279 = vmatpush1.msra.mxu0 0.0
      %1280 = vmatprep.subr.mxu0 0.0
      %1281 = vmatpush1.msra.mxu0 0.0
      %1282 = vmatprep.subr.mxu0 0.0
      %1283 = vmatpush1.msra.mxu0 0.0
      %1284 = vmatprep.subr.mxu0 0.0
      %1285 = vmatpush1.msra.mxu0 0.0
      %1286 = vmatprep.subr.mxu0 0.0
      %1287 = vmatpush1.msra.mxu0 0.0
      %1288 = vmatprep.subr.mxu0 0.0
      %1289 = vmatpush1.msra.mxu0 0.0
      %1290 = vmatprep.subr.mxu0 0.0
      %1291 = vmatpush1.msra.mxu0 0.0
      %1292 = vmatprep.subr.mxu0 0.0
      %1293 = vmatpush1.msra.mxu0 0.0
      %1294 = vmatprep.subr.mxu0 0.0
      %1295 = vmatpush1.msra.mxu0 0.0
      %1296 = vmatprep.subr.mxu0 0.0
      %1297 = vmatpush1.msra.mxu0 0.0
      %1298 = vmatprep.subr.mxu0 0.0
      %1299 = vmatpush1.msra.mxu0 0.0
      %1300 = vmatprep.subr.mxu0 0.0
      %1301 = vmatpush1.msra.mxu0 0.0
      %1302 = vmatprep.subr.mxu0 0.0
      %1303 = vmatpush1.msra.mxu0 0.0
      %1304 = vmatprep.subr.mxu0 0.0
      %1305 = vmatpush1.msra.mxu0 0.0
      %1306 = vmatprep.mubr.f32.mxu0 0.0
      %1307 = vmatmul.mubr.f32.gmra.mrb[0].mxu0 %v1240
      %v1308 = vpop.f32.mrb[0].mxu0
      %v1309 = vadd.f32 %v1237, %v1308
      %v1310 = vpop.f32.mrb[0].mxu0
      %1311 = vdwg.mxu0
      %v1312 = vxor.u32 %v1309, 2147483648
      %v1313 = vmul.f32 %v1312, 1.442695
      %v1314 = vpow.pop %v1313
      %v1315 = vadd.f32 %v1314, 1.0
      %v1316 = vrcp.pop %v1315
      %v1317 = vmul.f32 1.0, %v1316
      %1318 = vst.msk [vmem:[%s408] sm:$0xff] %vm687, %v1317
      %p1319 = scmp.lt.s32.totalorder %s23, 2
      %s1320 = scalar_select %p1319, %s23, 2
      %s1321 = smul.addr %s1320, 8
      %s1322 = scalar_lea.vmem %s12, %s1321
      // Predicated region
      $region69: #{tpu_custom_call.1} parent=67 // pred_check
        %p1323 = pneg %p298
      $region70: #{tpu_custom_call.1} parent=67 // pred_check_branch
        %1325 = sbr.rel (%p1323) target = $region72
      $region71: #{tpu_custom_call.1} parent=67 // pred_region
        _
      $region72: #{tpu_custom_call.1} parent=67 // pred_fallthru
        _
    $region68: #{tpu_custom_call.1} parent=5 // pred_fallthru
      _
    %p1326 = scmp.le.s32.totalorder 2, %s18
    // Predicated region
    $region73: #{tpu_custom_call.1} parent=5 // pred_check
      %p1327 = pneg %p1326
    $region74: #{tpu_custom_call.1} parent=5 // pred_check_branch
      %1329 = sbr.rel (%p1327) target = $region76
    $region75: #{tpu_custom_call.1} parent=5 // pred_region
      %s1330 = ssub.s32 %s18, 2
      // Predicated region
      $region77: #{tpu_custom_call.1} parent=75 // pred_check
        %p1331 = pneg %p304
      $region78: #{tpu_custom_call.1} parent=75 // pred_check_branch
        %1333 = sbr.rel (%p1331) target = $region80
      $region79: #{tpu_custom_call.1} parent=75 // pred_region
        %p1334 = scmp.lt.s32.totalorder %s24, 2
        %s1335 = scalar_select %p1334, %s24, 2
        %s1336 = smul.addr %s1335, 8
        %s1337 = scalar_lea.vmem %s12, %s1336
      $region80: #{tpu_custom_call.1} parent=75 // pred_fallthru
        _
    $region76: #{tpu_custom_call.1} parent=5 // pred_fallthru
      _
  $region6: #{tpu_custom_call.1} parent=0 // loop_footer
    %s22 = sadd.s32 1, %s18
  $region7: #{tpu_custom_call.1} parent=0 // loop_footer_branch
    %17 = sbr.rel target = $region3
  $region8: #{tpu_custom_call.1} parent=0 // loop_exit
    _

</llo_original>
